<compile_context>
chip_gen: v6e
topology: v6e:2x2x1
jax: 0.10.0
libtpu: 0.0.40
codegen_flags: <defaults>
</compile_context>

<pallas_src>
import jax
import jax.numpy as jnp
from jax.experimental import pallas as pl
from jax.experimental.pallas import tpu as pltpu


# ----------------------------------------------------------------------------
# Kernel: depthwise k x k (stride s) conv + block-diagonal 1x1 pointwise conv
# for one batch element, on lane-dense (rows, W*C) tiles.
# ----------------------------------------------------------------------------
def make_dsconv_kernel(k, s, Ho, Wo, Cin, Cout):
    def kernel(x_ref, wd_ref, bd_ref, wbd_ref, bp_ref, o_ref):
        # x_ref  : (1, s, s, Hc, Wc*Cin)   bf16, space-to-depth, lane-dense
        # wd_ref : (k*k, Wo*Cin)           f32, depthwise taps tiled across Wo
        # bd_ref : (1, Wo*Cin)             f32, depthwise bias tiled across Wo
        # wbd_ref: (Wo*Cin, Wo*Cout)       bf16, block-diagonal pointwise weight
        # bp_ref : (1, Wo*Cout)            f32, pointwise bias tiled across Wo
        # o_ref  : (1, Ho, Wo*Cout)        f32
        # depthwise bias folded into the accumulator init
        acc = jnp.broadcast_to(bd_ref[...], (Ho, Wo * Cin)).astype(jnp.float32)
        for i in range(k):                       # kernel row
            r0 = i // s
            for jm in range(s):                  # column phase (j % s)
                # one row-band load per (tap-row, phase); upcast once
                band = x_ref[0, i % s, jm, r0:r0 + Ho, :].astype(jnp.float32)
                for j in range(jm, k, s):        # kernel cols with j % s == jm
                    c0 = (j // s) * Cin
                    w_tap = wd_ref[i * k + j:i * k + j + 1, :]   # (1, Wo*Cin)
                    acc = acc + band[:, c0:c0 + Wo * Cin] * w_tap

        # 1x1 pointwise conv as a lane-dense MXU matmul (no relayout):
        # (Ho, Wo*Cin) @ (Wo*Cin, Wo*Cout) -> (Ho, Wo*Cout), K = Wo*Cin.
        out = jnp.dot(acc.astype(jnp.bfloat16), wbd_ref[...],
                      preferred_element_type=jnp.float32)
        out = out + bp_ref[...]
        o_ref[...] = out.reshape(1, Ho, Wo * Cout).astype(o_ref.dtype)

    return kernel


# ----------------------------------------------------------------------------
# Wrapper: NCHW in / NCHW out, PyTorch-shaped weights.
#   wd: (Cin, 1, k, k)   bd: (Cin,)   wp: (Cout, Cin, 1, 1)   bp: (Cout,)
# ----------------------------------------------------------------------------
def dsconv(x_nchw, wd, bd, wp, bp, *, filter_size, padding=0, stride=1):
    k, s, pad = filter_size, stride, padding
    N, Cin, H, W = x_nchw.shape
    Cout = wp.shape[0]

    Hp, Wp = H + 2 * pad, W + 2 * pad
    Ho = (Hp - k) // s + 1
    Wo = (Wp - k) // s + 1
    Hp2 = -(-Hp // s) * s            # round padded extent up to stride multiple
    Wp2 = -(-Wp // s) * s
    Hc, Wc = Hp2 // s, Wp2 // s

    # Reflection-pad index tables (matches nn.ReflectionPad2d).  Rows/cols in
    # [Hp, Hp2) / [Wp, Wp2) are never read by any tap; clamping just keeps the
    # gather in bounds.
    def reflect_idx(n_padded, n_in):
        r = jnp.abs(jnp.arange(n_padded) - pad)
        r = jnp.where(r >= n_in, 2 * (n_in - 1) - r, r)
        return jnp.clip(r, 0, n_in - 1).astype(jnp.int32)

    h_map = reflect_idx(Hp2, H)
    w_map = reflect_idx(Wp2, W)

    # Fused pad + NCHW->NHWC + space-to-depth + lane flatten in ONE gather:
    # xr[n, a, b, hc, wc*Cin + c] = x[n, c, hmap[hc*s+a], wmap[wc*s+b]]
    a_idx = jnp.arange(s).reshape(s, 1, 1, 1, 1)
    b_idx = jnp.arange(s).reshape(1, s, 1, 1, 1)
    hc_idx = jnp.arange(Hc).reshape(1, 1, Hc, 1, 1)
    wc_idx = jnp.arange(Wc).reshape(1, 1, 1, Wc, 1)
    c_idx = jnp.arange(Cin).reshape(1, 1, 1, 1, Cin)
    xr = x_nchw[:, c_idx, h_map[hc_idx * s + a_idx], w_map[wc_idx * s + b_idx]]
    xr = xr.reshape(N, s, s, Hc, Wc * Cin).astype(jnp.bfloat16)

    # Weight prep.
    wd_taps = jnp.transpose(wd[:, 0], (1, 2, 0)).reshape(k * k, Cin)
    wd_tiled = jnp.tile(wd_taps, (1, Wo)).astype(jnp.float32)       # (k*k, Wo*Cin)
    bd_tiled = jnp.tile(bd, Wo).reshape(1, Wo * Cin).astype(jnp.float32)
    wp_2d = jnp.transpose(wp[:, :, 0, 0], (1, 0)).astype(jnp.float32)  # (Cin, Cout)
    # Block-diagonal pointwise weight: block b holds wp -> (Wo*Cin, Wo*Cout).
    wbd = jnp.kron(jnp.eye(Wo, dtype=jnp.float32), wp_2d).astype(jnp.bfloat16)
    bp_tiled = jnp.tile(bp, Wo).reshape(1, Wo * Cout).astype(jnp.float32)

    kern = make_dsconv_kernel(k, s, Ho, Wo, Cin, Cout)
    out = pl.pallas_call(
        kern,
        out_shape=jax.ShapeDtypeStruct((N, Ho, Wo * Cout), jnp.float32),
        grid=(N,),
        in_specs=[
            pl.BlockSpec((1, s, s, Hc, Wc * Cin), lambda n: (n, 0, 0, 0, 0)),
            pl.BlockSpec((k * k, Wo * Cin), lambda n: (0, 0)),
            pl.BlockSpec((1, Wo * Cin), lambda n: (0, 0)),
            pl.BlockSpec((Wo * Cin, Wo * Cout), lambda n: (0, 0)),
            pl.BlockSpec((1, Wo * Cout), lambda n: (0, 0)),
        ],
        out_specs=pl.BlockSpec((1, Ho, Wo * Cout), lambda n: (n, 0, 0)),
        compiler_params=pltpu.CompilerParams(
            dimension_semantics=("parallel",),
            vmem_limit_bytes=32 * 1024 * 1024,
        ),
    )(xr, wd_tiled, bd_tiled, wbd, bp_tiled)

    # (N, Ho, Wo*Cout) -> (N, Ho, Wo, Cout) -> NCHW
    out = out.reshape(N, Ho, Wo, Cout)
    return jnp.transpose(out, (0, 3, 1, 2))


# ----------------------------------------------------------------------------
# Pure-JAX reference (matches the PyTorch DSConv forward, full f32).
# ----------------------------------------------------------------------------
def dsconv_reference(x, wd, bd, wp, bp, *, k, s, pad):
    xp = jnp.pad(x, ((0, 0), (0, 0), (pad, pad), (pad, pad)), mode="reflect")
    dw = jax.lax.conv_general_dilated(
        xp, wd, window_strides=(s, s), padding="VALID",
        dimension_numbers=("NCHW", "OIHW", "NCHW"),
        feature_group_count=x.shape[1])
    dw = dw + bd[None, :, None, None]
    out = jax.lax.conv_general_dilated(
        dw, wp, window_strides=(1, 1), padding="VALID",
        dimension_numbers=("NCHW", "OIHW", "NCHW"))
    return out + bp[None, :, None, None]


if __name__ == "__main__":
    key = jax.random.PRNGKey(0)

    def run_case(key, N, Cin, Cout, H, W, k, pad, s):
        k1, k2, k3, k4, k5 = jax.random.split(key, 5)
        x = jax.random.normal(k1, (N, Cin, H, W), jnp.float32)
        wd = 0.25 * jax.random.normal(k2, (Cin, 1, k, k), jnp.float32)
        bd = 0.05 * jax.random.normal(k3, (Cin,), jnp.float32)
        wp = (1.0 / Cin ** 0.5) * jax.random.normal(k4, (Cout, Cin, 1, 1), jnp.float32)
        bp = 0.05 * jax.random.normal(k5, (Cout,), jnp.float32)

        f = jax.jit(lambda *a: dsconv(*a, filter_size=k, padding=pad, stride=s))
        out = jax.block_until_ready(f(x, wd, bd, wp, bp))

        ref = dsconv_reference(x, wd, bd, wp, bp, k=k, s=s, pad=pad)
        assert out.shape == ref.shape, (out.shape, ref.shape)
        assert bool(jnp.all(jnp.isfinite(out)))
        # bf16 activation storage + bf16 MXU operands vs. full-f32 reference.
        err = float(jnp.max(jnp.abs(out - ref)))
        assert err < 5e-2, f"max abs err {err}"
        return out

    kA, kB = jax.random.split(key)
    # stride-2 "down" config: DSConv(16 -> 32, filter 4, pad 1, stride 2)
    run_case(kA, N=2, Cin=16, Cout=32, H=32, W=32, k=4, pad=1, s=2)
    # stride-1 "think" config: DSConv(32 -> 32, filter 3, pad 1, stride 1)
    run_case(kB, N=2, Cin=32, Cout=32, H=16, W=16, k=3, pad=1, s=1)

    print("KERNEL_OK")
</pallas_src>

<mosaic_0001>
module attributes {stable_mosaic.version = 11 : i64} {
  func.func @kernel(%arg0: i32, %arg1: memref<1x2x2x17x272xbf16, #tpu.memory_space<vmem>>, %arg2: memref<16x256xf32, #tpu.memory_space<vmem>>, %arg3: memref<1x256xf32, #tpu.memory_space<vmem>>, %arg4: memref<256x512xbf16, #tpu.memory_space<vmem>>, %arg5: memref<1x512xf32, #tpu.memory_space<vmem>>, %arg6: memref<1x16x512xf32, #tpu.memory_space<vmem>>) attributes {dimension_semantics = [#tpu.dimension_semantics<parallel>], iteration_bounds = array<i64: 2>, scalar_prefetch = 0 : i64, scratch_operands = 0 : i64, tpu.core_type = #tpu.core_type<tc>, window_params = [{transform_indices = @transform_0, window_bounds = array<i64: 1, 2, 2, 17, 272>}, {pipeline_mode = #tpu.pipeline_mode<synchronous>, transform_indices = @transform_1, window_bounds = array<i64: 16, 256>}, {pipeline_mode = #tpu.pipeline_mode<synchronous>, transform_indices = @transform_2, window_bounds = array<i64: 1, 256>}, {pipeline_mode = #tpu.pipeline_mode<synchronous>, transform_indices = @transform_3, window_bounds = array<i64: 256, 512>}, {pipeline_mode = #tpu.pipeline_mode<synchronous>, transform_indices = @transform_4, window_bounds = array<i64: 1, 512>}, {transform_indices = @transform_5, window_bounds = array<i64: 1, 16, 512>}]} {
    %c0 = arith.constant 0 : index
    %c0_0 = arith.constant 0 : index
    %0 = vector.load %arg3[%c0, %c0_0] : memref<1x256xf32, #tpu.memory_space<vmem>>, vector<1x256xf32>
    %1 = vector.shape_cast %0 : vector<1x256xf32> to vector<1x256xf32>
    %2 = vector.broadcast %1 : vector<1x256xf32> to vector<16x256xf32>
    %c0_1 = arith.constant 0 : index
    %c0_2 = arith.constant 0 : index
    %c0_3 = arith.constant 0 : index
    %c0_4 = arith.constant 0 : index
    %c0_5 = arith.constant 0 : index
    %3 = vector.load %arg1[%c0_1, %c0_2, %c0_3, %c0_4, %c0_5] : memref<1x2x2x17x272xbf16, #tpu.memory_space<vmem>>, vector<1x1x1x16x272xbf16>
    %4 = vector.shape_cast %3 : vector<1x1x1x16x272xbf16> to vector<16x272xbf16>
    %5 = arith.extf %4 : vector<16x272xbf16> to vector<16x272xf32>
    %c0_6 = arith.constant 0 : index
    %c0_7 = arith.constant 0 : index
    %6 = vector.load %arg2[%c0_6, %c0_7] : memref<16x256xf32, #tpu.memory_space<vmem>>, vector<1x256xf32>
    %7 = vector.extract_strided_slice %5 {offsets = [0, 0], sizes = [16, 256], strides = [1, 1]} : vector<16x272xf32> to vector<16x256xf32>
    %8 = vector.broadcast %6 : vector<1x256xf32> to vector<16x256xf32>
    %9 = arith.mulf %7, %8 : vector<16x256xf32>
    %10 = arith.addf %2, %9 : vector<16x256xf32>
    %c2 = arith.constant 2 : index
    %c0_8 = arith.constant 0 : index
    %11 = vector.load %arg2[%c2, %c0_8] : memref<16x256xf32, #tpu.memory_space<vmem>>, vector<1x256xf32>
    %12 = vector.extract_strided_slice %5 {offsets = [0, 16], sizes = [16, 256], strides = [1, 1]} : vector<16x272xf32> to vector<16x256xf32>
    %13 = vector.broadcast %11 : vector<1x256xf32> to vector<16x256xf32>
    %14 = arith.mulf %12, %13 : vector<16x256xf32>
    %15 = arith.addf %10, %14 : vector<16x256xf32>
    %c0_9 = arith.constant 0 : index
    %c0_10 = arith.constant 0 : index
    %c1 = arith.constant 1 : index
    %c0_11 = arith.constant 0 : index
    %c0_12 = arith.constant 0 : index
    %16 = vector.load %arg1[%c0_9, %c0_10, %c1, %c0_11, %c0_12] : memref<1x2x2x17x272xbf16, #tpu.memory_space<vmem>>, vector<1x1x1x16x272xbf16>
    %17 = vector.shape_cast %16 : vector<1x1x1x16x272xbf16> to vector<16x272xbf16>
    %18 = arith.extf %17 : vector<16x272xbf16> to vector<16x272xf32>
    %c1_13 = arith.constant 1 : index
    %c0_14 = arith.constant 0 : index
    %19 = vector.load %arg2[%c1_13, %c0_14] : memref<16x256xf32, #tpu.memory_space<vmem>>, vector<1x256xf32>
    %20 = vector.extract_strided_slice %18 {offsets = [0, 0], sizes = [16, 256], strides = [1, 1]} : vector<16x272xf32> to vector<16x256xf32>
    %21 = vector.broadcast %19 : vector<1x256xf32> to vector<16x256xf32>
    %22 = arith.mulf %20, %21 : vector<16x256xf32>
    %23 = arith.addf %15, %22 : vector<16x256xf32>
    %c3 = arith.constant 3 : index
    %c0_15 = arith.constant 0 : index
    %24 = vector.load %arg2[%c3, %c0_15] : memref<16x256xf32, #tpu.memory_space<vmem>>, vector<1x256xf32>
    %25 = vector.extract_strided_slice %18 {offsets = [0, 16], sizes = [16, 256], strides = [1, 1]} : vector<16x272xf32> to vector<16x256xf32>
    %26 = vector.broadcast %24 : vector<1x256xf32> to vector<16x256xf32>
    %27 = arith.mulf %25, %26 : vector<16x256xf32>
    %28 = arith.addf %23, %27 : vector<16x256xf32>
    %c0_16 = arith.constant 0 : index
    %c1_17 = arith.constant 1 : index
    %c0_18 = arith.constant 0 : index
    %c0_19 = arith.constant 0 : index
    %c0_20 = arith.constant 0 : index
    %29 = vector.load %arg1[%c0_16, %c1_17, %c0_18, %c0_19, %c0_20] : memref<1x2x2x17x272xbf16, #tpu.memory_space<vmem>>, vector<1x1x1x16x272xbf16>
    %30 = vector.shape_cast %29 : vector<1x1x1x16x272xbf16> to vector<16x272xbf16>
    %31 = arith.extf %30 : vector<16x272xbf16> to vector<16x272xf32>
    %c4 = arith.constant 4 : index
    %c0_21 = arith.constant 0 : index
    %32 = vector.load %arg2[%c4, %c0_21] : memref<16x256xf32, #tpu.memory_space<vmem>>, vector<1x256xf32>
    %33 = vector.extract_strided_slice %31 {offsets = [0, 0], sizes = [16, 256], strides = [1, 1]} : vector<16x272xf32> to vector<16x256xf32>
    %34 = vector.broadcast %32 : vector<1x256xf32> to vector<16x256xf32>
    %35 = arith.mulf %33, %34 : vector<16x256xf32>
    %36 = arith.addf %28, %35 : vector<16x256xf32>
    %c6 = arith.constant 6 : index
    %c0_22 = arith.constant 0 : index
    %37 = vector.load %arg2[%c6, %c0_22] : memref<16x256xf32, #tpu.memory_space<vmem>>, vector<1x256xf32>
    %38 = vector.extract_strided_slice %31 {offsets = [0, 16], sizes = [16, 256], strides = [1, 1]} : vector<16x272xf32> to vector<16x256xf32>
    %39 = vector.broadcast %37 : vector<1x256xf32> to vector<16x256xf32>
    %40 = arith.mulf %38, %39 : vector<16x256xf32>
    %41 = arith.addf %36, %40 : vector<16x256xf32>
    %c0_23 = arith.constant 0 : index
    %c1_24 = arith.constant 1 : index
    %c1_25 = arith.constant 1 : index
    %c0_26 = arith.constant 0 : index
    %c0_27 = arith.constant 0 : index
    %42 = vector.load %arg1[%c0_23, %c1_24, %c1_25, %c0_26, %c0_27] : memref<1x2x2x17x272xbf16, #tpu.memory_space<vmem>>, vector<1x1x1x16x272xbf16>
    %43 = vector.shape_cast %42 : vector<1x1x1x16x272xbf16> to vector<16x272xbf16>
    %44 = arith.extf %43 : vector<16x272xbf16> to vector<16x272xf32>
    %c5 = arith.constant 5 : index
    %c0_28 = arith.constant 0 : index
    %45 = vector.load %arg2[%c5, %c0_28] : memref<16x256xf32, #tpu.memory_space<vmem>>, vector<1x256xf32>
    %46 = vector.extract_strided_slice %44 {offsets = [0, 0], sizes = [16, 256], strides = [1, 1]} : vector<16x272xf32> to vector<16x256xf32>
    %47 = vector.broadcast %45 : vector<1x256xf32> to vector<16x256xf32>
    %48 = arith.mulf %46, %47 : vector<16x256xf32>
    %49 = arith.addf %41, %48 : vector<16x256xf32>
    %c7 = arith.constant 7 : index
    %c0_29 = arith.constant 0 : index
    %50 = vector.load %arg2[%c7, %c0_29] : memref<16x256xf32, #tpu.memory_space<vmem>>, vector<1x256xf32>
    %51 = vector.extract_strided_slice %44 {offsets = [0, 16], sizes = [16, 256], strides = [1, 1]} : vector<16x272xf32> to vector<16x256xf32>
    %52 = vector.broadcast %50 : vector<1x256xf32> to vector<16x256xf32>
    %53 = arith.mulf %51, %52 : vector<16x256xf32>
    %54 = arith.addf %49, %53 : vector<16x256xf32>
    %c0_30 = arith.constant 0 : index
    %c0_31 = arith.constant 0 : index
    %c0_32 = arith.constant 0 : index
    %c1_33 = arith.constant 1 : index
    %c0_34 = arith.constant 0 : index
    %55 = vector.load %arg1[%c0_30, %c0_31, %c0_32, %c1_33, %c0_34] : memref<1x2x2x17x272xbf16, #tpu.memory_space<vmem>>, vector<1x1x1x16x272xbf16>
    %56 = vector.shape_cast %55 : vector<1x1x1x16x272xbf16> to vector<16x272xbf16>
    %57 = arith.extf %56 : vector<16x272xbf16> to vector<16x272xf32>
    %c8 = arith.constant 8 : index
    %c0_35 = arith.constant 0 : index
    %58 = vector.load %arg2[%c8, %c0_35] : memref<16x256xf32, #tpu.memory_space<vmem>>, vector<1x256xf32>
    %59 = vector.extract_strided_slice %57 {offsets = [0, 0], sizes = [16, 256], strides = [1, 1]} : vector<16x272xf32> to vector<16x256xf32>
    %60 = vector.broadcast %58 : vector<1x256xf32> to vector<16x256xf32>
    %61 = arith.mulf %59, %60 : vector<16x256xf32>
    %62 = arith.addf %54, %61 : vector<16x256xf32>
    %c10 = arith.constant 10 : index
    %c0_36 = arith.constant 0 : index
    %63 = vector.load %arg2[%c10, %c0_36] : memref<16x256xf32, #tpu.memory_space<vmem>>, vector<1x256xf32>
    %64 = vector.extract_strided_slice %57 {offsets = [0, 16], sizes = [16, 256], strides = [1, 1]} : vector<16x272xf32> to vector<16x256xf32>
    %65 = vector.broadcast %63 : vector<1x256xf32> to vector<16x256xf32>
    %66 = arith.mulf %64, %65 : vector<16x256xf32>
    %67 = arith.addf %62, %66 : vector<16x256xf32>
    %c0_37 = arith.constant 0 : index
    %c0_38 = arith.constant 0 : index
    %c1_39 = arith.constant 1 : index
    %c1_40 = arith.constant 1 : index
    %c0_41 = arith.constant 0 : index
    %68 = vector.load %arg1[%c0_37, %c0_38, %c1_39, %c1_40, %c0_41] : memref<1x2x2x17x272xbf16, #tpu.memory_space<vmem>>, vector<1x1x1x16x272xbf16>
    %69 = vector.shape_cast %68 : vector<1x1x1x16x272xbf16> to vector<16x272xbf16>
    %70 = arith.extf %69 : vector<16x272xbf16> to vector<16x272xf32>
    %c9 = arith.constant 9 : index
    %c0_42 = arith.constant 0 : index
    %71 = vector.load %arg2[%c9, %c0_42] : memref<16x256xf32, #tpu.memory_space<vmem>>, vector<1x256xf32>
    %72 = vector.extract_strided_slice %70 {offsets = [0, 0], sizes = [16, 256], strides = [1, 1]} : vector<16x272xf32> to vector<16x256xf32>
    %73 = vector.broadcast %71 : vector<1x256xf32> to vector<16x256xf32>
    %74 = arith.mulf %72, %73 : vector<16x256xf32>
    %75 = arith.addf %67, %74 : vector<16x256xf32>
    %c11 = arith.constant 11 : index
    %c0_43 = arith.constant 0 : index
    %76 = vector.load %arg2[%c11, %c0_43] : memref<16x256xf32, #tpu.memory_space<vmem>>, vector<1x256xf32>
    %77 = vector.extract_strided_slice %70 {offsets = [0, 16], sizes = [16, 256], strides = [1, 1]} : vector<16x272xf32> to vector<16x256xf32>
    %78 = vector.broadcast %76 : vector<1x256xf32> to vector<16x256xf32>
    %79 = arith.mulf %77, %78 : vector<16x256xf32>
    %80 = arith.addf %75, %79 : vector<16x256xf32>
    %c0_44 = arith.constant 0 : index
    %c1_45 = arith.constant 1 : index
    %c0_46 = arith.constant 0 : index
    %c1_47 = arith.constant 1 : index
    %c0_48 = arith.constant 0 : index
    %81 = vector.load %arg1[%c0_44, %c1_45, %c0_46, %c1_47, %c0_48] : memref<1x2x2x17x272xbf16, #tpu.memory_space<vmem>>, vector<1x1x1x16x272xbf16>
    %82 = vector.shape_cast %81 : vector<1x1x1x16x272xbf16> to vector<16x272xbf16>
    %83 = arith.extf %82 : vector<16x272xbf16> to vector<16x272xf32>
    %c12 = arith.constant 12 : index
    %c0_49 = arith.constant 0 : index
    %84 = vector.load %arg2[%c12, %c0_49] : memref<16x256xf32, #tpu.memory_space<vmem>>, vector<1x256xf32>
    %85 = vector.extract_strided_slice %83 {offsets = [0, 0], sizes = [16, 256], strides = [1, 1]} : vector<16x272xf32> to vector<16x256xf32>
    %86 = vector.broadcast %84 : vector<1x256xf32> to vector<16x256xf32>
    %87 = arith.mulf %85, %86 : vector<16x256xf32>
    %88 = arith.addf %80, %87 : vector<16x256xf32>
    %c14 = arith.constant 14 : index
    %c0_50 = arith.constant 0 : index
    %89 = vector.load %arg2[%c14, %c0_50] : memref<16x256xf32, #tpu.memory_space<vmem>>, vector<1x256xf32>
    %90 = vector.extract_strided_slice %83 {offsets = [0, 16], sizes = [16, 256], strides = [1, 1]} : vector<16x272xf32> to vector<16x256xf32>
    %91 = vector.broadcast %89 : vector<1x256xf32> to vector<16x256xf32>
    %92 = arith.mulf %90, %91 : vector<16x256xf32>
    %93 = arith.addf %88, %92 : vector<16x256xf32>
    %c0_51 = arith.constant 0 : index
    %c1_52 = arith.constant 1 : index
    %c1_53 = arith.constant 1 : index
    %c1_54 = arith.constant 1 : index
    %c0_55 = arith.constant 0 : index
    %94 = vector.load %arg1[%c0_51, %c1_52, %c1_53, %c1_54, %c0_55] : memref<1x2x2x17x272xbf16, #tpu.memory_space<vmem>>, vector<1x1x1x16x272xbf16>
    %95 = vector.shape_cast %94 : vector<1x1x1x16x272xbf16> to vector<16x272xbf16>
    %96 = arith.extf %95 : vector<16x272xbf16> to vector<16x272xf32>
    %c13 = arith.constant 13 : index
    %c0_56 = arith.constant 0 : index
    %97 = vector.load %arg2[%c13, %c0_56] : memref<16x256xf32, #tpu.memory_space<vmem>>, vector<1x256xf32>
    %98 = vector.extract_strided_slice %96 {offsets = [0, 0], sizes = [16, 256], strides = [1, 1]} : vector<16x272xf32> to vector<16x256xf32>
    %99 = vector.broadcast %97 : vector<1x256xf32> to vector<16x256xf32>
    %100 = arith.mulf %98, %99 : vector<16x256xf32>
    %101 = arith.addf %93, %100 : vector<16x256xf32>
    %c15 = arith.constant 15 : index
    %c0_57 = arith.constant 0 : index
    %102 = vector.load %arg2[%c15, %c0_57] : memref<16x256xf32, #tpu.memory_space<vmem>>, vector<1x256xf32>
    %103 = vector.extract_strided_slice %96 {offsets = [0, 16], sizes = [16, 256], strides = [1, 1]} : vector<16x272xf32> to vector<16x256xf32>
    %104 = vector.broadcast %102 : vector<1x256xf32> to vector<16x256xf32>
    %105 = arith.mulf %103, %104 : vector<16x256xf32>
    %106 = arith.addf %101, %105 : vector<16x256xf32>
    %107 = arith.truncf %106 : vector<16x256xf32> to vector<16x256xbf16>
    %c0_58 = arith.constant 0 : index
    %c0_59 = arith.constant 0 : index
    %108 = vector.load %arg4[%c0_58, %c0_59] : memref<256x512xbf16, #tpu.memory_space<vmem>>, vector<256x512xbf16>
    %cst = arith.constant dense<0.000000e+00> : vector<16x512xf32>
    %109 = tpu.matmul %107, %108, %cst {dimension_numbers = #tpu.dot_dimension_numbers<[1], [0], [0], [1], [0, 0, 1, 1], [], []>} : vector<16x256xbf16>, vector<256x512xbf16>, vector<16x512xf32> -> vector<16x512xf32>
    %c0_60 = arith.constant 0 : index
    %c0_61 = arith.constant 0 : index
    %110 = vector.load %arg5[%c0_60, %c0_61] : memref<1x512xf32, #tpu.memory_space<vmem>>, vector<1x512xf32>
    %111 = vector.broadcast %110 : vector<1x512xf32> to vector<16x512xf32>
    %112 = arith.addf %109, %111 : vector<16x512xf32>
    %113 = vector.shape_cast %112 : vector<16x512xf32> to vector<1x16x512xf32>
    %c0_62 = arith.constant 0 : index
    %c0_63 = arith.constant 0 : index
    %c0_64 = arith.constant 0 : index
    %114 = vector.load %arg6[%c0_62, %c0_63, %c0_64] : memref<1x16x512xf32, #tpu.memory_space<vmem>>, vector<1x16x512xf32>
    tpu.vector_store %arg6[%c0_62, %c0_63, %c0_64], %113 {strides = array<i32>} : memref<1x16x512xf32, #tpu.memory_space<vmem>>, vector<1x16x512xf32>,
    return
  }
  func.func @transform_0(%arg0: i32) -> (i32, i32, i32, i32, i32) {
    %c0_i32 = arith.constant 0 : i32
    %c0_i32_0 = arith.constant 0 : i32
    %c0_i32_1 = arith.constant 0 : i32
    %c0_i32_2 = arith.constant 0 : i32
    %c0_i32_3 = arith.constant 0 : i32
    return %arg0, %c0_i32, %c0_i32_0, %c0_i32_1, %c0_i32_2 : i32, i32, i32, i32, i32
  }
  func.func @transform_1(%arg0: i32) -> (i32, i32) {
    %c0_i32 = arith.constant 0 : i32
    %c0_i32_0 = arith.constant 0 : i32
    %c0_i32_1 = arith.constant 0 : i32
    return %c0_i32, %c0_i32_0 : i32, i32
  }
  func.func @transform_2(%arg0: i32) -> (i32, i32) {
    %c0_i32 = arith.constant 0 : i32
    %c0_i32_0 = arith.constant 0 : i32
    %c0_i32_1 = arith.constant 0 : i32
    return %c0_i32, %c0_i32_0 : i32, i32
  }
  func.func @transform_3(%arg0: i32) -> (i32, i32) {
    %c0_i32 = arith.constant 0 : i32
    %c0_i32_0 = arith.constant 0 : i32
    %c0_i32_1 = arith.constant 0 : i32
    return %c0_i32, %c0_i32_0 : i32, i32
  }
  func.func @transform_4(%arg0: i32) -> (i32, i32) {
    %c0_i32 = arith.constant 0 : i32
    %c0_i32_0 = arith.constant 0 : i32
    %c0_i32_1 = arith.constant 0 : i32
    return %c0_i32, %c0_i32_0 : i32, i32
  }
  func.func @transform_5(%arg0: i32) -> (i32, i32, i32) {
    %c0_i32 = arith.constant 0 : i32
    %c0_i32_0 = arith.constant 0 : i32
    %c0_i32_1 = arith.constant 0 : i32
    return %arg0, %c0_i32, %c0_i32_0 : i32, i32, i32
  }
}

</mosaic_0001>

<llo_original>
// kernel: tile.17
$region0: #{tile.17}
  %s0 = inlined_call_operand.vmem [shape: f32[16,16,16], index: 0, kind: input, shape index: {}]
  %s1 = inlined_call_operand.vmem [shape: f32[16,256], index: 1, kind: output, shape index: {}]
  %v2 = vld [vmem:[%s0] ss:$8 sm:$0xf]
  %v3 = vld [vmem:[%s0] ss:$8 sm:$0xf0]
  %vm4 = vcmask 1047556
  %v5 = vsel %vm4, %v3, %v2
  %vm6 = vcmask 130048
  %7 = vst.msk [vmem:[%s1] ss:$8 sm:$0x3] %vm6, %v5
  %s8 = scalar_lea.vmem %s1, 4294967281
  %9 = vst.msk [vmem:[%s8] ss:$8 sm:$0xc] %vm6, %v5
  %s10 = scalar_lea.vmem %s1, 4294967266
  %11 = vst.msk [vmem:[%s10] ss:$8 sm:$0x30] %vm6, %v5
  %s12 = scalar_lea.vmem %s1, 4294967251
  %13 = vst.msk [vmem:[%s12] ss:$8 sm:$0xc0] %vm6, %v5
  %s14 = scalar_lea.vmem %s0, 64
  %v15 = vld [vmem:[%s14] ss:$8 sm:$0xf]
  %s16 = scalar_lea.vmem %s0, 64
  %v17 = vld [vmem:[%s16] ss:$8 sm:$0xf0]
  %vm18 = vcmask 1047556
  %v19 = vsel %vm18, %v17, %v15
  %vm20 = vcmask 130048
  %s21 = scalar_lea.vmem %s1, 4
  %22 = vst.msk [vmem:[%s21] ss:$8 sm:$0x3] %vm20, %v19
  %s23 = scalar_lea.vmem %s1, 4294967285
  %24 = vst.msk [vmem:[%s23] ss:$8 sm:$0xc] %vm20, %v19
  %s25 = scalar_lea.vmem %s1, 4294967270
  %26 = vst.msk [vmem:[%s25] ss:$8 sm:$0x30] %vm20, %v19
  %s27 = scalar_lea.vmem %s1, 4294967255
  %28 = vst.msk [vmem:[%s27] ss:$8 sm:$0xc0] %vm20, %v19
  %s29 = scalar_lea.vmem %s0, 128
  %v30 = vld [vmem:[%s29] ss:$8 sm:$0xf]
  %s31 = scalar_lea.vmem %s0, 128
  %v32 = vld [vmem:[%s31] ss:$8 sm:$0xf0]
  %vm33 = vcmask 1047556
  %v34 = vsel %vm33, %v32, %v30
  %vm35 = vcmask 130048
  %s36 = scalar_lea.vmem %s1, 16
  %37 = vst.msk [vmem:[%s36] ss:$8 sm:$0x3] %vm35, %v34
  %s38 = scalar_lea.vmem %s1, 1
  %39 = vst.msk [vmem:[%s38] ss:$8 sm:$0xc] %vm35, %v34
  %s40 = scalar_lea.vmem %s1, 4294967282
  %41 = vst.msk [vmem:[%s40] ss:$8 sm:$0x30] %vm35, %v34
  %s42 = scalar_lea.vmem %s1, 4294967267
  %43 = vst.msk [vmem:[%s42] ss:$8 sm:$0xc0] %vm35, %v34
  %s44 = scalar_lea.vmem %s0, 192
  %v45 = vld [vmem:[%s44] ss:$8 sm:$0xf]
  %s46 = scalar_lea.vmem %s0, 192
  %v47 = vld [vmem:[%s46] ss:$8 sm:$0xf0]
  %vm48 = vcmask 1047556
  %v49 = vsel %vm48, %v47, %v45
  %vm50 = vcmask 130048
  %s51 = scalar_lea.vmem %s1, 20
  %52 = vst.msk [vmem:[%s51] ss:$8 sm:$0x3] %vm50, %v49
  %s53 = scalar_lea.vmem %s1, 5
  %54 = vst.msk [vmem:[%s53] ss:$8 sm:$0xc] %vm50, %v49
  %s55 = scalar_lea.vmem %s1, 4294967286
  %56 = vst.msk [vmem:[%s55] ss:$8 sm:$0x30] %vm50, %v49
  %s57 = scalar_lea.vmem %s1, 4294967271
  %58 = vst.msk [vmem:[%s57] ss:$8 sm:$0xc0] %vm50, %v49
  %s59 = scalar_lea.vmem %s0, 7
  %s60 = smov 3
  %v61 = vld [vmem:[%s59] ss:$16 sm:%s60]
  %s62 = scalar_lea.vmem %s0, 7
  %s63 = smov 12
  %v64 = vld [vmem:[%s62] ss:$16 sm:%s63]
  %vm65 = vcmask 1043458
  %v66 = vsel %vm65, %v64, %v61
  %s67 = scalar_lea.vmem %s0, 7
  %s68 = smov 48
  %v69 = vld [vmem:[%s67] ss:$16 sm:%s68]
  %vm70 = vcmask 1045508
  %v71 = vsel %vm70, %v69, %v66
  %s72 = scalar_lea.vmem %s0, 7
  %s73 = smov 192
  %v74 = vld [vmem:[%s72] ss:$16 sm:%s73]
  %vm75 = vcmask 1047558
  %v76 = vsel %vm75, %v74, %v71
  %77 = vrot.lane.b32.xlu0 %v76, 112
  %v78 = vpop.permute.xlu0 %77
  %vm79 = vcmask 1048448
  %80 = vst.msk [vmem:[%s1] sm:$0xff] %vm79, %v78
  %s81 = scalar_lea.vmem %s0, 15
  %s82 = smov 3
  %v83 = vld [vmem:[%s81] ss:$16 sm:%s82]
  %s84 = scalar_lea.vmem %s0, 15
  %s85 = smov 12
  %v86 = vld [vmem:[%s84] ss:$16 sm:%s85]
  %vm87 = vcmask 1043458
  %v88 = vsel %vm87, %v86, %v83
  %s89 = scalar_lea.vmem %s0, 15
  %s90 = smov 48
  %v91 = vld [vmem:[%s89] ss:$16 sm:%s90]
  %vm92 = vcmask 1045508
  %v93 = vsel %vm92, %v91, %v88
  %s94 = scalar_lea.vmem %s0, 15
  %s95 = smov 192
  %v96 = vld [vmem:[%s94] ss:$16 sm:%s95]
  %vm97 = vcmask 1047558
  %v98 = vsel %vm97, %v96, %v93
  %99 = vrot.lane.b32.xlu0 %v98, 112
  %v100 = vpop.permute.xlu0 %99
  %vm101 = vcmask 1048448
  %s102 = scalar_lea.vmem %s1, 8
  %103 = vst.msk [vmem:[%s102] sm:$0xff] %vm101, %v100
  %s104 = scalar_lea.vmem %s0, 135
  %s105 = smov 3
  %v106 = vld [vmem:[%s104] ss:$16 sm:%s105]
  %s107 = scalar_lea.vmem %s0, 135
  %s108 = smov 12
  %v109 = vld [vmem:[%s107] ss:$16 sm:%s108]
  %vm110 = vcmask 1043458
  %v111 = vsel %vm110, %v109, %v106
  %s112 = scalar_lea.vmem %s0, 135
  %s113 = smov 48
  %v114 = vld [vmem:[%s112] ss:$16 sm:%s113]
  %vm115 = vcmask 1045508
  %v116 = vsel %vm115, %v114, %v111
  %s117 = scalar_lea.vmem %s0, 135
  %s118 = smov 192
  %v119 = vld [vmem:[%s117] ss:$16 sm:%s118]
  %vm120 = vcmask 1047558
  %v121 = vsel %vm120, %v119, %v116
  %122 = vrot.lane.b32.xlu0 %v121, 112
  %v123 = vpop.permute.xlu0 %122
  %vm124 = vcmask 1048448
  %s125 = scalar_lea.vmem %s1, 16
  %126 = vst.msk [vmem:[%s125] sm:$0xff] %vm124, %v123
  %s127 = scalar_lea.vmem %s0, 143
  %s128 = smov 3
  %v129 = vld [vmem:[%s127] ss:$16 sm:%s128]
  %s130 = scalar_lea.vmem %s0, 143
  %s131 = smov 12
  %v132 = vld [vmem:[%s130] ss:$16 sm:%s131]
  %vm133 = vcmask 1043458
  %v134 = vsel %vm133, %v132, %v129
  %s135 = scalar_lea.vmem %s0, 143
  %s136 = smov 48
  %v137 = vld [vmem:[%s135] ss:$16 sm:%s136]
  %vm138 = vcmask 1045508
  %v139 = vsel %vm138, %v137, %v134
  %s140 = scalar_lea.vmem %s0, 143
  %s141 = smov 192
  %v142 = vld [vmem:[%s140] ss:$16 sm:%s141]
  %vm143 = vcmask 1047558
  %v144 = vsel %vm143, %v142, %v139
  %145 = vrot.lane.b32.xlu0 %v144, 112
  %v146 = vpop.permute.xlu0 %145
  %vm147 = vcmask 1048448
  %s148 = scalar_lea.vmem %s1, 24
  %149 = vst.msk [vmem:[%s148] sm:$0xff] %vm147, %v146
  %s150 = scalar_lea.vmem %s0, 6
  %s151 = smov 3
  %v152 = vld [vmem:[%s150] ss:$16 sm:%s151]
  %s153 = scalar_lea.vmem %s0, 6
  %s154 = smov 12
  %v155 = vld [vmem:[%s153] ss:$16 sm:%s154]
  %vm156 = vcmask 1043458
  %v157 = vsel %vm156, %v155, %v152
  %s158 = scalar_lea.vmem %s0, 6
  %s159 = smov 48
  %v160 = vld [vmem:[%s158] ss:$16 sm:%s159]
  %vm161 = vcmask 1045508
  %v162 = vsel %vm161, %v160, %v157
  %s163 = scalar_lea.vmem %s0, 6
  %s164 = smov 192
  %v165 = vld [vmem:[%s163] ss:$16 sm:%s164]
  %vm166 = vcmask 1047558
  %v167 = vsel %vm166, %v165, %v162
  %168 = vrot.lane.b32.xlu0 %v167, 96
  %v169 = vpop.permute.xlu0 %168
  %vm170 = vcmask 917248
  %171 = vst.msk [vmem:[%s1] sm:$0xff] %vm170, %v169
  %s172 = scalar_lea.vmem %s0, 14
  %s173 = smov 3
  %v174 = vld [vmem:[%s172] ss:$16 sm:%s173]
  %s175 = scalar_lea.vmem %s0, 14
  %s176 = smov 12
  %v177 = vld [vmem:[%s175] ss:$16 sm:%s176]
  %vm178 = vcmask 1043458
  %v179 = vsel %vm178, %v177, %v174
  %s180 = scalar_lea.vmem %s0, 14
  %s181 = smov 48
  %v182 = vld [vmem:[%s180] ss:$16 sm:%s181]
  %vm183 = vcmask 1045508
  %v184 = vsel %vm183, %v182, %v179
  %s185 = scalar_lea.vmem %s0, 14
  %s186 = smov 192
  %v187 = vld [vmem:[%s185] ss:$16 sm:%s186]
  %vm188 = vcmask 1047558
  %v189 = vsel %vm188, %v187, %v184
  %190 = vrot.lane.b32.xlu0 %v189, 96
  %v191 = vpop.permute.xlu0 %190
  %vm192 = vcmask 917248
  %s193 = scalar_lea.vmem %s1, 8
  %194 = vst.msk [vmem:[%s193] sm:$0xff] %vm192, %v191
  %s195 = scalar_lea.vmem %s0, 134
  %s196 = smov 3
  %v197 = vld [vmem:[%s195] ss:$16 sm:%s196]
  %s198 = scalar_lea.vmem %s0, 134
  %s199 = smov 12
  %v200 = vld [vmem:[%s198] ss:$16 sm:%s199]
  %vm201 = vcmask 1043458
  %v202 = vsel %vm201, %v200, %v197
  %s203 = scalar_lea.vmem %s0, 134
  %s204 = smov 48
  %v205 = vld [vmem:[%s203] ss:$16 sm:%s204]
  %vm206 = vcmask 1045508
  %v207 = vsel %vm206, %v205, %v202
  %s208 = scalar_lea.vmem %s0, 134
  %s209 = smov 192
  %v210 = vld [vmem:[%s208] ss:$16 sm:%s209]
  %vm211 = vcmask 1047558
  %v212 = vsel %vm211, %v210, %v207
  %213 = vrot.lane.b32.xlu0 %v212, 96
  %v214 = vpop.permute.xlu0 %213
  %vm215 = vcmask 917248
  %s216 = scalar_lea.vmem %s1, 16
  %217 = vst.msk [vmem:[%s216] sm:$0xff] %vm215, %v214
  %s218 = scalar_lea.vmem %s0, 142
  %s219 = smov 3
  %v220 = vld [vmem:[%s218] ss:$16 sm:%s219]
  %s221 = scalar_lea.vmem %s0, 142
  %s222 = smov 12
  %v223 = vld [vmem:[%s221] ss:$16 sm:%s222]
  %vm224 = vcmask 1043458
  %v225 = vsel %vm224, %v223, %v220
  %s226 = scalar_lea.vmem %s0, 142
  %s227 = smov 48
  %v228 = vld [vmem:[%s226] ss:$16 sm:%s227]
  %vm229 = vcmask 1045508
  %v230 = vsel %vm229, %v228, %v225
  %s231 = scalar_lea.vmem %s0, 142
  %s232 = smov 192
  %v233 = vld [vmem:[%s231] ss:$16 sm:%s232]
  %vm234 = vcmask 1047558
  %v235 = vsel %vm234, %v233, %v230
  %236 = vrot.lane.b32.xlu0 %v235, 96
  %v237 = vpop.permute.xlu0 %236
  %vm238 = vcmask 917248
  %s239 = scalar_lea.vmem %s1, 24
  %240 = vst.msk [vmem:[%s239] sm:$0xff] %vm238, %v237
  %s241 = scalar_lea.vmem %s0, 5
  %s242 = smov 3
  %v243 = vld [vmem:[%s241] ss:$16 sm:%s242]
  %s244 = scalar_lea.vmem %s0, 5
  %s245 = smov 12
  %v246 = vld [vmem:[%s244] ss:$16 sm:%s245]
  %vm247 = vcmask 1043458
  %v248 = vsel %vm247, %v246, %v243
  %s249 = scalar_lea.vmem %s0, 5
  %s250 = smov 48
  %v251 = vld [vmem:[%s249] ss:$16 sm:%s250]
  %vm252 = vcmask 1045508
  %v253 = vsel %vm252, %v251, %v248
  %s254 = scalar_lea.vmem %s0, 5
  %s255 = smov 192
  %v256 = vld [vmem:[%s254] ss:$16 sm:%s255]
  %vm257 = vcmask 1047558
  %v258 = vsel %vm257, %v256, %v253
  %259 = vrot.lane.b32.xlu0 %v258, 80
  %v260 = vpop.permute.xlu0 %259
  %vm261 = vcmask 786048
  %262 = vst.msk [vmem:[%s1] sm:$0xff] %vm261, %v260
  %s263 = scalar_lea.vmem %s0, 13
  %s264 = smov 3
  %v265 = vld [vmem:[%s263] ss:$16 sm:%s264]
  %s266 = scalar_lea.vmem %s0, 13
  %s267 = smov 12
  %v268 = vld [vmem:[%s266] ss:$16 sm:%s267]
  %vm269 = vcmask 1043458
  %v270 = vsel %vm269, %v268, %v265
  %s271 = scalar_lea.vmem %s0, 13
  %s272 = smov 48
  %v273 = vld [vmem:[%s271] ss:$16 sm:%s272]
  %vm274 = vcmask 1045508
  %v275 = vsel %vm274, %v273, %v270
  %s276 = scalar_lea.vmem %s0, 13
  %s277 = smov 192
  %v278 = vld [vmem:[%s276] ss:$16 sm:%s277]
  %vm279 = vcmask 1047558
  %v280 = vsel %vm279, %v278, %v275
  %281 = vrot.lane.b32.xlu0 %v280, 80
  %v282 = vpop.permute.xlu0 %281
  %vm283 = vcmask 786048
  %s284 = scalar_lea.vmem %s1, 8
  %285 = vst.msk [vmem:[%s284] sm:$0xff] %vm283, %v282
  %s286 = scalar_lea.vmem %s0, 133
  %s287 = smov 3
  %v288 = vld [vmem:[%s286] ss:$16 sm:%s287]
  %s289 = scalar_lea.vmem %s0, 133
  %s290 = smov 12
  %v291 = vld [vmem:[%s289] ss:$16 sm:%s290]
  %vm292 = vcmask 1043458
  %v293 = vsel %vm292, %v291, %v288
  %s294 = scalar_lea.vmem %s0, 133
  %s295 = smov 48
  %v296 = vld [vmem:[%s294] ss:$16 sm:%s295]
  %vm297 = vcmask 1045508
  %v298 = vsel %vm297, %v296, %v293
  %s299 = scalar_lea.vmem %s0, 133
  %s300 = smov 192
  %v301 = vld [vmem:[%s299] ss:$16 sm:%s300]
  %vm302 = vcmask 1047558
  %v303 = vsel %vm302, %v301, %v298
  %304 = vrot.lane.b32.xlu0 %v303, 80
  %v305 = vpop.permute.xlu0 %304
  %vm306 = vcmask 786048
  %s307 = scalar_lea.vmem %s1, 16
  %308 = vst.msk [vmem:[%s307] sm:$0xff] %vm306, %v305
  %s309 = scalar_lea.vmem %s0, 141
  %s310 = smov 3
  %v311 = vld [vmem:[%s309] ss:$16 sm:%s310]
  %s312 = scalar_lea.vmem %s0, 141
  %s313 = smov 12
  %v314 = vld [vmem:[%s312] ss:$16 sm:%s313]
  %vm315 = vcmask 1043458
  %v316 = vsel %vm315, %v314, %v311
  %s317 = scalar_lea.vmem %s0, 141
  %s318 = smov 48
  %v319 = vld [vmem:[%s317] ss:$16 sm:%s318]
  %vm320 = vcmask 1045508
  %v321 = vsel %vm320, %v319, %v316
  %s322 = scalar_lea.vmem %s0, 141
  %s323 = smov 192
  %v324 = vld [vmem:[%s322] ss:$16 sm:%s323]
  %vm325 = vcmask 1047558
  %v326 = vsel %vm325, %v324, %v321
  %327 = vrot.lane.b32.xlu0 %v326, 80
  %v328 = vpop.permute.xlu0 %327
  %vm329 = vcmask 786048
  %s330 = scalar_lea.vmem %s1, 24
  %331 = vst.msk [vmem:[%s330] sm:$0xff] %vm329, %v328
  %s332 = scalar_lea.vmem %s0, 4
  %s333 = smov 3
  %v334 = vld [vmem:[%s332] ss:$16 sm:%s333]
  %s335 = scalar_lea.vmem %s0, 4
  %s336 = smov 12
  %v337 = vld [vmem:[%s335] ss:$16 sm:%s336]
  %vm338 = vcmask 1043458
  %v339 = vsel %vm338, %v337, %v334
  %s340 = scalar_lea.vmem %s0, 4
  %s341 = smov 48
  %v342 = vld [vmem:[%s340] ss:$16 sm:%s341]
  %vm343 = vcmask 1045508
  %v344 = vsel %vm343, %v342, %v339
  %s345 = scalar_lea.vmem %s0, 4
  %s346 = smov 192
  %v347 = vld [vmem:[%s345] ss:$16 sm:%s346]
  %vm348 = vcmask 1047558
  %v349 = vsel %vm348, %v347, %v344
  %350 = vrot.lane.b32.xlu0 %v349, 64
  %v351 = vpop.permute.xlu0 %350
  %vm352 = vcmask 654848
  %353 = vst.msk [vmem:[%s1] sm:$0xff] %vm352, %v351
  %s354 = scalar_lea.vmem %s0, 12
  %s355 = smov 3
  %v356 = vld [vmem:[%s354] ss:$16 sm:%s355]
  %s357 = scalar_lea.vmem %s0, 12
  %s358 = smov 12
  %v359 = vld [vmem:[%s357] ss:$16 sm:%s358]
  %vm360 = vcmask 1043458
  %v361 = vsel %vm360, %v359, %v356
  %s362 = scalar_lea.vmem %s0, 12
  %s363 = smov 48
  %v364 = vld [vmem:[%s362] ss:$16 sm:%s363]
  %vm365 = vcmask 1045508
  %v366 = vsel %vm365, %v364, %v361
  %s367 = scalar_lea.vmem %s0, 12
  %s368 = smov 192
  %v369 = vld [vmem:[%s367] ss:$16 sm:%s368]
  %vm370 = vcmask 1047558
  %v371 = vsel %vm370, %v369, %v366
  %372 = vrot.lane.b32.xlu0 %v371, 64
  %v373 = vpop.permute.xlu0 %372
  %vm374 = vcmask 654848
  %s375 = scalar_lea.vmem %s1, 8
  %376 = vst.msk [vmem:[%s375] sm:$0xff] %vm374, %v373
  %s377 = scalar_lea.vmem %s0, 132
  %s378 = smov 3
  %v379 = vld [vmem:[%s377] ss:$16 sm:%s378]
  %s380 = scalar_lea.vmem %s0, 132
  %s381 = smov 12
  %v382 = vld [vmem:[%s380] ss:$16 sm:%s381]
  %vm383 = vcmask 1043458
  %v384 = vsel %vm383, %v382, %v379
  %s385 = scalar_lea.vmem %s0, 132
  %s386 = smov 48
  %v387 = vld [vmem:[%s385] ss:$16 sm:%s386]
  %vm388 = vcmask 1045508
  %v389 = vsel %vm388, %v387, %v384
  %s390 = scalar_lea.vmem %s0, 132
  %s391 = smov 192
  %v392 = vld [vmem:[%s390] ss:$16 sm:%s391]
  %vm393 = vcmask 1047558
  %v394 = vsel %vm393, %v392, %v389
  %395 = vrot.lane.b32.xlu0 %v394, 64
  %v396 = vpop.permute.xlu0 %395
  %vm397 = vcmask 654848
  %s398 = scalar_lea.vmem %s1, 16
  %399 = vst.msk [vmem:[%s398] sm:$0xff] %vm397, %v396
  %s400 = scalar_lea.vmem %s0, 140
  %s401 = smov 3
  %v402 = vld [vmem:[%s400] ss:$16 sm:%s401]
  %s403 = scalar_lea.vmem %s0, 140
  %s404 = smov 12
  %v405 = vld [vmem:[%s403] ss:$16 sm:%s404]
  %vm406 = vcmask 1043458
  %v407 = vsel %vm406, %v405, %v402
  %s408 = scalar_lea.vmem %s0, 140
  %s409 = smov 48
  %v410 = vld [vmem:[%s408] ss:$16 sm:%s409]
  %vm411 = vcmask 1045508
  %v412 = vsel %vm411, %v410, %v407
  %s413 = scalar_lea.vmem %s0, 140
  %s414 = smov 192
  %v415 = vld [vmem:[%s413] ss:$16 sm:%s414]
  %vm416 = vcmask 1047558
  %v417 = vsel %vm416, %v415, %v412
  %418 = vrot.lane.b32.xlu0 %v417, 64
  %v419 = vpop.permute.xlu0 %418
  %vm420 = vcmask 654848
  %s421 = scalar_lea.vmem %s1, 24
  %422 = vst.msk [vmem:[%s421] sm:$0xff] %vm420, %v419
  %s423 = scalar_lea.vmem %s0, 3
  %s424 = smov 3
  %v425 = vld [vmem:[%s423] ss:$16 sm:%s424]
  %s426 = scalar_lea.vmem %s0, 3
  %s427 = smov 12
  %v428 = vld [vmem:[%s426] ss:$16 sm:%s427]
  %vm429 = vcmask 1043458
  %v430 = vsel %vm429, %v428, %v425
  %s431 = scalar_lea.vmem %s0, 3
  %s432 = smov 48
  %v433 = vld [vmem:[%s431] ss:$16 sm:%s432]
  %vm434 = vcmask 1045508
  %v435 = vsel %vm434, %v433, %v430
  %s436 = scalar_lea.vmem %s0, 3
  %s437 = smov 192
  %v438 = vld [vmem:[%s436] ss:$16 sm:%s437]
  %vm439 = vcmask 1047558
  %v440 = vsel %vm439, %v438, %v435
  %441 = vrot.lane.b32.xlu0 %v440, 48
  %v442 = vpop.permute.xlu0 %441
  %vm443 = vcmask 523648
  %444 = vst.msk [vmem:[%s1] sm:$0xff] %vm443, %v442
  %s445 = scalar_lea.vmem %s0, 11
  %s446 = smov 3
  %v447 = vld [vmem:[%s445] ss:$16 sm:%s446]
  %s448 = scalar_lea.vmem %s0, 11
  %s449 = smov 12
  %v450 = vld [vmem:[%s448] ss:$16 sm:%s449]
  %vm451 = vcmask 1043458
  %v452 = vsel %vm451, %v450, %v447
  %s453 = scalar_lea.vmem %s0, 11
  %s454 = smov 48
  %v455 = vld [vmem:[%s453] ss:$16 sm:%s454]
  %vm456 = vcmask 1045508
  %v457 = vsel %vm456, %v455, %v452
  %s458 = scalar_lea.vmem %s0, 11
  %s459 = smov 192
  %v460 = vld [vmem:[%s458] ss:$16 sm:%s459]
  %vm461 = vcmask 1047558
  %v462 = vsel %vm461, %v460, %v457
  %463 = vrot.lane.b32.xlu0 %v462, 48
  %v464 = vpop.permute.xlu0 %463
  %vm465 = vcmask 523648
  %s466 = scalar_lea.vmem %s1, 8
  %467 = vst.msk [vmem:[%s466] sm:$0xff] %vm465, %v464
  %s468 = scalar_lea.vmem %s0, 131
  %s469 = smov 3
  %v470 = vld [vmem:[%s468] ss:$16 sm:%s469]
  %s471 = scalar_lea.vmem %s0, 131
  %s472 = smov 12
  %v473 = vld [vmem:[%s471] ss:$16 sm:%s472]
  %vm474 = vcmask 1043458
  %v475 = vsel %vm474, %v473, %v470
  %s476 = scalar_lea.vmem %s0, 131
  %s477 = smov 48
  %v478 = vld [vmem:[%s476] ss:$16 sm:%s477]
  %vm479 = vcmask 1045508
  %v480 = vsel %vm479, %v478, %v475
  %s481 = scalar_lea.vmem %s0, 131
  %s482 = smov 192
  %v483 = vld [vmem:[%s481] ss:$16 sm:%s482]
  %vm484 = vcmask 1047558
  %v485 = vsel %vm484, %v483, %v480
  %486 = vrot.lane.b32.xlu0 %v485, 48
  %v487 = vpop.permute.xlu0 %486
  %vm488 = vcmask 523648
  %s489 = scalar_lea.vmem %s1, 16
  %490 = vst.msk [vmem:[%s489] sm:$0xff] %vm488, %v487
  %s491 = scalar_lea.vmem %s0, 139
  %s492 = smov 3
  %v493 = vld [vmem:[%s491] ss:$16 sm:%s492]
  %s494 = scalar_lea.vmem %s0, 139
  %s495 = smov 12
  %v496 = vld [vmem:[%s494] ss:$16 sm:%s495]
  %vm497 = vcmask 1043458
  %v498 = vsel %vm497, %v496, %v493
  %s499 = scalar_lea.vmem %s0, 139
  %s500 = smov 48
  %v501 = vld [vmem:[%s499] ss:$16 sm:%s500]
  %vm502 = vcmask 1045508
  %v503 = vsel %vm502, %v501, %v498
  %s504 = scalar_lea.vmem %s0, 139
  %s505 = smov 192
  %v506 = vld [vmem:[%s504] ss:$16 sm:%s505]
  %vm507 = vcmask 1047558
  %v508 = vsel %vm507, %v506, %v503
  %509 = vrot.lane.b32.xlu0 %v508, 48
  %v510 = vpop.permute.xlu0 %509
  %vm511 = vcmask 523648
  %s512 = scalar_lea.vmem %s1, 24
  %513 = vst.msk [vmem:[%s512] sm:$0xff] %vm511, %v510
  %s514 = scalar_lea.vmem %s0, 2
  %s515 = smov 3
  %v516 = vld [vmem:[%s514] ss:$16 sm:%s515]
  %s517 = scalar_lea.vmem %s0, 2
  %s518 = smov 12
  %v519 = vld [vmem:[%s517] ss:$16 sm:%s518]
  %vm520 = vcmask 1043458
  %v521 = vsel %vm520, %v519, %v516
  %s522 = scalar_lea.vmem %s0, 2
  %s523 = smov 48
  %v524 = vld [vmem:[%s522] ss:$16 sm:%s523]
  %vm525 = vcmask 1045508
  %v526 = vsel %vm525, %v524, %v521
  %s527 = scalar_lea.vmem %s0, 2
  %s528 = smov 192
  %v529 = vld [vmem:[%s527] ss:$16 sm:%s528]
  %vm530 = vcmask 1047558
  %v531 = vsel %vm530, %v529, %v526
  %532 = vrot.lane.b32.xlu0 %v531, 32
  %v533 = vpop.permute.xlu0 %532
  %vm534 = vcmask 392448
  %535 = vst.msk [vmem:[%s1] sm:$0xff] %vm534, %v533
  %s536 = scalar_lea.vmem %s0, 10
  %s537 = smov 3
  %v538 = vld [vmem:[%s536] ss:$16 sm:%s537]
  %s539 = scalar_lea.vmem %s0, 10
  %s540 = smov 12
  %v541 = vld [vmem:[%s539] ss:$16 sm:%s540]
  %vm542 = vcmask 1043458
  %v543 = vsel %vm542, %v541, %v538
  %s544 = scalar_lea.vmem %s0, 10
  %s545 = smov 48
  %v546 = vld [vmem:[%s544] ss:$16 sm:%s545]
  %vm547 = vcmask 1045508
  %v548 = vsel %vm547, %v546, %v543
  %s549 = scalar_lea.vmem %s0, 10
  %s550 = smov 192
  %v551 = vld [vmem:[%s549] ss:$16 sm:%s550]
  %vm552 = vcmask 1047558
  %v553 = vsel %vm552, %v551, %v548
  %554 = vrot.lane.b32.xlu0 %v553, 32
  %v555 = vpop.permute.xlu0 %554
  %vm556 = vcmask 392448
  %s557 = scalar_lea.vmem %s1, 8
  %558 = vst.msk [vmem:[%s557] sm:$0xff] %vm556, %v555
  %s559 = scalar_lea.vmem %s0, 130
  %s560 = smov 3
  %v561 = vld [vmem:[%s559] ss:$16 sm:%s560]
  %s562 = scalar_lea.vmem %s0, 130
  %s563 = smov 12
  %v564 = vld [vmem:[%s562] ss:$16 sm:%s563]
  %vm565 = vcmask 1043458
  %v566 = vsel %vm565, %v564, %v561
  %s567 = scalar_lea.vmem %s0, 130
  %s568 = smov 48
  %v569 = vld [vmem:[%s567] ss:$16 sm:%s568]
  %vm570 = vcmask 1045508
  %v571 = vsel %vm570, %v569, %v566
  %s572 = scalar_lea.vmem %s0, 130
  %s573 = smov 192
  %v574 = vld [vmem:[%s572] ss:$16 sm:%s573]
  %vm575 = vcmask 1047558
  %v576 = vsel %vm575, %v574, %v571
  %577 = vrot.lane.b32.xlu0 %v576, 32
  %v578 = vpop.permute.xlu0 %577
  %vm579 = vcmask 392448
  %s580 = scalar_lea.vmem %s1, 16
  %581 = vst.msk [vmem:[%s580] sm:$0xff] %vm579, %v578
  %s582 = scalar_lea.vmem %s0, 138
  %s583 = smov 3
  %v584 = vld [vmem:[%s582] ss:$16 sm:%s583]
  %s585 = scalar_lea.vmem %s0, 138
  %s586 = smov 12
  %v587 = vld [vmem:[%s585] ss:$16 sm:%s586]
  %vm588 = vcmask 1043458
  %v589 = vsel %vm588, %v587, %v584
  %s590 = scalar_lea.vmem %s0, 138
  %s591 = smov 48
  %v592 = vld [vmem:[%s590] ss:$16 sm:%s591]
  %vm593 = vcmask 1045508
  %v594 = vsel %vm593, %v592, %v589
  %s595 = scalar_lea.vmem %s0, 138
  %s596 = smov 192
  %v597 = vld [vmem:[%s595] ss:$16 sm:%s596]
  %vm598 = vcmask 1047558
  %v599 = vsel %vm598, %v597, %v594
  %600 = vrot.lane.b32.xlu0 %v599, 32
  %v601 = vpop.permute.xlu0 %600
  %vm602 = vcmask 392448
  %s603 = scalar_lea.vmem %s1, 24
  %604 = vst.msk [vmem:[%s603] sm:$0xff] %vm602, %v601
  %s605 = scalar_lea.vmem %s0, 1
  %s606 = smov 3
  %v607 = vld [vmem:[%s605] ss:$16 sm:%s606]
  %s608 = scalar_lea.vmem %s0, 1
  %s609 = smov 12
  %v610 = vld [vmem:[%s608] ss:$16 sm:%s609]
  %vm611 = vcmask 1043458
  %v612 = vsel %vm611, %v610, %v607
  %s613 = scalar_lea.vmem %s0, 1
  %s614 = smov 48
  %v615 = vld [vmem:[%s613] ss:$16 sm:%s614]
  %vm616 = vcmask 1045508
  %v617 = vsel %vm616, %v615, %v612
  %s618 = scalar_lea.vmem %s0, 1
  %s619 = smov 192
  %v620 = vld [vmem:[%s618] ss:$16 sm:%s619]
  %vm621 = vcmask 1047558
  %v622 = vsel %vm621, %v620, %v617
  %623 = vrot.lane.b32.xlu0 %v622, 16
  %v624 = vpop.permute.xlu0 %623
  %vm625 = vcmask 261248
  %626 = vst.msk [vmem:[%s1] sm:$0xff] %vm625, %v624
  %s627 = scalar_lea.vmem %s0, 9
  %s628 = smov 3
  %v629 = vld [vmem:[%s627] ss:$16 sm:%s628]
  %s630 = scalar_lea.vmem %s0, 9
  %s631 = smov 12
  %v632 = vld [vmem:[%s630] ss:$16 sm:%s631]
  %vm633 = vcmask 1043458
  %v634 = vsel %vm633, %v632, %v629
  %s635 = scalar_lea.vmem %s0, 9
  %s636 = smov 48
  %v637 = vld [vmem:[%s635] ss:$16 sm:%s636]
  %vm638 = vcmask 1045508
  %v639 = vsel %vm638, %v637, %v634
  %s640 = scalar_lea.vmem %s0, 9
  %s641 = smov 192
  %v642 = vld [vmem:[%s640] ss:$16 sm:%s641]
  %vm643 = vcmask 1047558
  %v644 = vsel %vm643, %v642, %v639
  %645 = vrot.lane.b32.xlu0 %v644, 16
  %v646 = vpop.permute.xlu0 %645
  %vm647 = vcmask 261248
  %s648 = scalar_lea.vmem %s1, 8
  %649 = vst.msk [vmem:[%s648] sm:$0xff] %vm647, %v646
  %s650 = scalar_lea.vmem %s0, 129
  %s651 = smov 3
  %v652 = vld [vmem:[%s650] ss:$16 sm:%s651]
  %s653 = scalar_lea.vmem %s0, 129
  %s654 = smov 12
  %v655 = vld [vmem:[%s653] ss:$16 sm:%s654]
  %vm656 = vcmask 1043458
  %v657 = vsel %vm656, %v655, %v652
  %s658 = scalar_lea.vmem %s0, 129
  %s659 = smov 48
  %v660 = vld [vmem:[%s658] ss:$16 sm:%s659]
  %vm661 = vcmask 1045508
  %v662 = vsel %vm661, %v660, %v657
  %s663 = scalar_lea.vmem %s0, 129
  %s664 = smov 192
  %v665 = vld [vmem:[%s663] ss:$16 sm:%s664]
  %vm666 = vcmask 1047558
  %v667 = vsel %vm666, %v665, %v662
  %668 = vrot.lane.b32.xlu0 %v667, 16
  %v669 = vpop.permute.xlu0 %668
  %vm670 = vcmask 261248
  %s671 = scalar_lea.vmem %s1, 16
  %672 = vst.msk [vmem:[%s671] sm:$0xff] %vm670, %v669
  %s673 = scalar_lea.vmem %s0, 137
  %s674 = smov 3
  %v675 = vld [vmem:[%s673] ss:$16 sm:%s674]
  %s676 = scalar_lea.vmem %s0, 137
  %s677 = smov 12
  %v678 = vld [vmem:[%s676] ss:$16 sm:%s677]
  %vm679 = vcmask 1043458
  %v680 = vsel %vm679, %v678, %v675
  %s681 = scalar_lea.vmem %s0, 137
  %s682 = smov 48
  %v683 = vld [vmem:[%s681] ss:$16 sm:%s682]
  %vm684 = vcmask 1045508
  %v685 = vsel %vm684, %v683, %v680
  %s686 = scalar_lea.vmem %s0, 137
  %s687 = smov 192
  %v688 = vld [vmem:[%s686] ss:$16 sm:%s687]
  %vm689 = vcmask 1047558
  %v690 = vsel %vm689, %v688, %v685
  %691 = vrot.lane.b32.xlu0 %v690, 16
  %v692 = vpop.permute.xlu0 %691
  %vm693 = vcmask 261248
  %s694 = scalar_lea.vmem %s1, 24
  %695 = vst.msk [vmem:[%s694] sm:$0xff] %vm693, %v692

// kernel: tile.26
$region0: #{tile.26}
  #allocation0 [shape = 's32[1]{0}', space=sflag, size = 0x4, scoped, tag = 'scoped memory for tile.26']
  %s0 = inlined_call_operand.vmem [shape: f32[32], index: 0, kind: input, shape index: {}]
  %s1 = inlined_call_operand.vmem [shape: f32[16,32], index: 1, kind: output, shape index: {}]
  // Predicated region
  $region2: #{tile.26} parent=0 // pred_check
    _
  $region3: #{tile.26} parent=0 // pred_check_branch
    %3 = sbr.rel (0) target = $region5
  $region4: #{tile.26} parent=0 // pred_region
    _
  $region5: #{tile.26} parent=0 // pred_fallthru
    _
  %v4 = vld [vmem:[%s0] ss:$0 sm:$0xff]
  %5 = vst [vmem:[%s1] sm:$0xff] %v4
  %s6 = scalar_lea.vmem %s1, 8
  %7 = vst [vmem:[%s6] sm:$0xff] %v4

// kernel: tile.27
$region0: #{tile.27}
  %s0 = inlined_call_operand.vmem [shape: f32[16,32], index: 0, kind: input, shape index: {}]
  %s1 = inlined_call_operand.vmem [shape: f32[1,512], index: 1, kind: output, shape index: {}]
  $region1: #{tile.27} parent=0
    #allocation0 [shape = 'u8[16384]{0}', space=vmem, size = 0x4000, scoped, tag = 'scoped mem for output reshape']
    %v2 = vld [vmem:[%s0] ss:$4 sm:$0xf]
    %vm3 = vcmask 261120
    %4 = vst.msk [vmem:[#allocation0] ss:$8 sm:$0xf] %vm3, %v2
    %s5 = scalar_lea.vmem %s0, 3
    %v6 = vld [vmem:[%s5] ss:$4 sm:$0xf]
    %7 = vrot.lane.b32.xlu0 %v6, 96
    %v8 = vpop.permute.xlu0 %7
    %vm9 = vcmask 1048320
    %10 = vst.msk [vmem:[#allocation0] ss:$8 sm:$0xf] %vm9, %v8
    %s11 = scalar_lea.vmem %s0, 2
    %v12 = vld [vmem:[%s11] ss:$4 sm:$0xf]
    %13 = vrot.lane.b32.xlu0 %v12, 64
    %v14 = vpop.permute.xlu0 %13
    %vm15 = vcmask 785920
    %16 = vst.msk [vmem:[#allocation0] ss:$8 sm:$0xf] %vm15, %v14
    %s17 = scalar_lea.vmem %s0, 1
    %v18 = vld [vmem:[%s17] ss:$4 sm:$0xf]
    %19 = vrot.lane.b32.xlu0 %v18, 32
    %v20 = vpop.permute.xlu0 %19
    %vm21 = vcmask 523520
    %22 = vst.msk [vmem:[#allocation0] ss:$8 sm:$0xf] %vm21, %v20
    %s24 = sshll.u32 1, 1
    %s25 = ssub.s32 %s24, 1
    %v27 = vld [vmem:[#allocation0] sm:%s25]
    %s28 = sshll.u32 1, 1
    %s29 = ssub.s32 %s28, 1
    %30 = vst [vmem:[%s1] sm:%s29] %v27
    %s31 = scalar_lea.vmem [#allocation0], 8
    %v32 = vld [vmem:[%s31] sm:%s25]
    %s33 = sshll.u32 1, 1
    %s34 = ssub.s32 %s33, 1
    %s35 = scalar_lea.vmem %s1, 1
    %36 = vst [vmem:[%s35] sm:%s34] %v32
    %s37 = scalar_lea.vmem [#allocation0], 16
    %v38 = vld [vmem:[%s37] sm:%s25]
    %s39 = sshll.u32 1, 1
    %s40 = ssub.s32 %s39, 1
    %s41 = smul.addr 1, 2
    %s42 = scalar_lea.vmem %s1, %s41
    %43 = vst [vmem:[%s42] sm:%s40] %v38
    %s44 = scalar_lea.vmem [#allocation0], 24
    %v45 = vld [vmem:[%s44] sm:%s25]
    %s46 = sshll.u32 1, 1
    %s47 = ssub.s32 %s46, 1
    %s48 = smul.addr 1, 3
    %s49 = scalar_lea.vmem %s1, %s48
    %50 = vst [vmem:[%s49] sm:%s47] %v45

// kernel: tile.21
$region0: #{tile.21}
  #allocation0 [shape = 's32[1]{0}', space=sflag, size = 0x4, scoped, tag = 'scoped memory for tile.21']
  %s0 = inlined_call_operand.vmem [shape: f32[16], index: 0, kind: input, shape index: {}]
  %s1 = inlined_call_operand.vmem [shape: f32[16,16], index: 1, kind: output, shape index: {}]
  // Predicated region
  $region2: #{tile.21} parent=0 // pred_check
    _
  $region3: #{tile.21} parent=0 // pred_check_branch
    %3 = sbr.rel (0) target = $region5
  $region4: #{tile.21} parent=0 // pred_region
    _
  $region5: #{tile.21} parent=0 // pred_fallthru
    _
  %v4 = vld [vmem:[%s0] ss:$0 sm:$0xff]
  %5 = vst [vmem:[%s1] sm:$0xff] %v4
  %s6 = scalar_lea.vmem %s1, 8
  %7 = vst [vmem:[%s6] sm:$0xff] %v4

// kernel: tile.22
$region0: #{tile.22}
  %s0 = inlined_call_operand.vmem [shape: f32[16,16], index: 0, kind: input, shape index: {}]
  %s1 = inlined_call_operand.vmem [shape: f32[1,256], index: 1, kind: output, shape index: {}]
  $region1: #{tile.22} parent=0
    #allocation0 [shape = 'u8[8192]{0}', space=vmem, size = 0x2000, scoped, tag = 'scoped mem for output reshape']
    %s2 = smov 3
    %v3 = vld [vmem:[%s0] ss:$8 sm:%s2]
    %vm4 = vcmask 130048
    %5 = vst.msk [vmem:[#allocation0] ss:$8 sm:$0x3] %vm4, %v3
    %s6 = scalar_lea.vmem %s0, 7
    %s7 = smov 3
    %v8 = vld [vmem:[%s6] ss:$8 sm:%s7]
    %9 = vrot.lane.b32.xlu0 %v8, 112
    %v10 = vpop.permute.xlu0 %9
    %vm11 = vcmask 1048448
    %12 = vst.msk [vmem:[#allocation0] ss:$8 sm:$0x3] %vm11, %v10
    %s13 = scalar_lea.vmem %s0, 6
    %s14 = smov 3
    %v15 = vld [vmem:[%s13] ss:$8 sm:%s14]
    %16 = vrot.lane.b32.xlu0 %v15, 96
    %v17 = vpop.permute.xlu0 %16
    %vm18 = vcmask 917248
    %19 = vst.msk [vmem:[#allocation0] ss:$8 sm:$0x3] %vm18, %v17
    %s20 = scalar_lea.vmem %s0, 5
    %s21 = smov 3
    %v22 = vld [vmem:[%s20] ss:$8 sm:%s21]
    %23 = vrot.lane.b32.xlu0 %v22, 80
    %v24 = vpop.permute.xlu0 %23
    %vm25 = vcmask 786048
    %26 = vst.msk [vmem:[#allocation0] ss:$8 sm:$0x3] %vm25, %v24
    %s27 = scalar_lea.vmem %s0, 4
    %s28 = smov 3
    %v29 = vld [vmem:[%s27] ss:$8 sm:%s28]
    %30 = vrot.lane.b32.xlu0 %v29, 64
    %v31 = vpop.permute.xlu0 %30
    %vm32 = vcmask 654848
    %33 = vst.msk [vmem:[#allocation0] ss:$8 sm:$0x3] %vm32, %v31
    %s34 = scalar_lea.vmem %s0, 3
    %s35 = smov 3
    %v36 = vld [vmem:[%s34] ss:$8 sm:%s35]
    %37 = vrot.lane.b32.xlu0 %v36, 48
    %v38 = vpop.permute.xlu0 %37
    %vm39 = vcmask 523648
    %40 = vst.msk [vmem:[#allocation0] ss:$8 sm:$0x3] %vm39, %v38
    %s41 = scalar_lea.vmem %s0, 2
    %s42 = smov 3
    %v43 = vld [vmem:[%s41] ss:$8 sm:%s42]
    %44 = vrot.lane.b32.xlu0 %v43, 32
    %v45 = vpop.permute.xlu0 %44
    %vm46 = vcmask 392448
    %47 = vst.msk [vmem:[#allocation0] ss:$8 sm:$0x3] %vm46, %v45
    %s48 = scalar_lea.vmem %s0, 1
    %s49 = smov 3
    %v50 = vld [vmem:[%s48] ss:$8 sm:%s49]
    %51 = vrot.lane.b32.xlu0 %v50, 16
    %v52 = vpop.permute.xlu0 %51
    %vm53 = vcmask 261248
    %54 = vst.msk [vmem:[#allocation0] ss:$8 sm:$0x3] %vm53, %v52
    %s56 = sshll.u32 1, 1
    %s57 = ssub.s32 %s56, 1
    %v59 = vld [vmem:[#allocation0] sm:%s57]
    %s60 = sshll.u32 1, 1
    %s61 = ssub.s32 %s60, 1
    %62 = vst [vmem:[%s1] sm:%s61] %v59
    %s63 = scalar_lea.vmem [#allocation0], 8
    %v64 = vld [vmem:[%s63] sm:%s57]
    %s65 = sshll.u32 1, 1
    %s66 = ssub.s32 %s65, 1
    %s67 = scalar_lea.vmem %s1, 1
    %68 = vst [vmem:[%s67] sm:%s66] %v64

// kernel: _lambda_.1
$region0: #{_lambda_.1}
  #allocation0 [shape = 'u32[]', space=smem, size = 0x4, offset = 0x4, fixed_abs, tag = 'smem constant byte address 0x4 - core index']
  #allocation1 [shape = 'u32[144,128]{1,0:T(1,128)}', space=vmem, size = 0x12000, scoped, tag = 'internal scratch']
  %s0 = inlined_call_operand.vmem [shape: bf16[2,2,2,17,272], index: 0, kind: input, shape index: {}]
  %s1 = inlined_call_operand.vmem [shape: f32[16,256], index: 1, kind: input, shape index: {}]
  %s2 = inlined_call_operand.vmem [shape: f32[1,256], index: 2, kind: input, shape index: {}]
  %s3 = inlined_call_operand.vmem [shape: bf16[256,512], index: 3, kind: input, shape index: {}]
  %s4 = inlined_call_operand.vmem [shape: f32[1,512], index: 4, kind: input, shape index: {}]
  %s5 = inlined_call_operand.vmem [shape: f32[2,16,512], index: 5, kind: output, shape index: {}]
  %s6 = sld [smem:[#allocation0]]
  $region53: #{_lambda_.1} parent=0
    _
  %s8 = ssub.s32 1, %s6
  %s9 = scalar_select 0, %s8, %s6
  loop: start=0, step=1, limit=4
  $region2: #{_lambda_.1} parent=0 // loop_pre_header
    _
  $region3: #{_lambda_.1} parent=0 // loop_header
    %s11 = sphi 0, %s15
    %p12 = scmp.ge.s32.totalorder %s11, 4
    %s21 = sphi 0, %s23
    %s24 = sphi 0, %s21
    %s25 = sphi 0, %s24
    %s41 = sphi 0, %s25
    %s45 = sphi 0, %s45
    %s47 = sphi 0, %s45
    %s48 = sphi 0, %s47
    %s62 = sphi 0, %s48
    %s66 = sphi 0, %s66
    %s68 = sphi 0, %s66
    %s69 = sphi 0, %s68
    %s83 = sphi 0, %s69
    %s87 = sphi 0, %s87
    %s89 = sphi 0, %s87
    %s90 = sphi 0, %s89
    %s104 = sphi 0, %s90
    %s108 = sphi 0, %s108
    %s110 = sphi 0, %s108
    %s111 = sphi 0, %s110
    %s125 = sphi 0, %s111
    %s131 = sphi 0, %s133
    %s134 = sphi 0, %s131
    %s135 = sphi 0, %s134
    %s151 = sphi 0, %s135
  $region4: #{_lambda_.1} parent=0 // loop_header_branch
    %14 = sbr.rel (%p12) target = $region8
  $region5: #{_lambda_.1} parent=0 // loop_body
    %s16 = ssub.s32 %s11, 1
    %s17 = ssub.s32 %s11, 2
    %s18 = sadd.s32 %s11, 1
    %s19 = ssub.s32 %s11, %s18
    %p20 = scmp.eq.s32.totalorder %s19, 0
    %s22 = sadd.s32 %s21, 1
    %s23 = scalar_select %p20, %s21, %s22
    %p26 = pneg %p20
    %p27 = scmp.eq.s32.totalorder %s11, 1
    %p28 = por %p26, %p27
    %p29 = scmp.ne.s32.totalorder %s21, %s24
    %p30 = scmp.eq.s32.totalorder %s11, 0
    %p31 = por %p29, %p30
    %p32 = scmp.ne.s32.totalorder %s21, %s24
    %p33 = scmp.eq.s32.totalorder %s16, 1
    %p34 = por %p32, %p33
    %p35 = scmp.ne.s32.totalorder %s24, %s25
    %p36 = scmp.eq.s32.totalorder %s16, 0
    %p37 = por %p35, %p36
    %p38 = scmp.ne.s32.totalorder %s24, %s25
    %p39 = scmp.eq.s32.totalorder %s17, 1
    %p40 = por %p38, %p39
    %p42 = scmp.ne.s32.totalorder %s25, %s41
    %p43 = scmp.eq.s32.totalorder %s17, 0
    %p44 = por %p42, %p43
    %s46 = sadd.s32 %s45, 1
    %p49 = scmp.eq.s32.totalorder %s11, 1
    %p50 = scmp.ne.s32.totalorder %s45, %s47
    %p51 = scmp.eq.s32.totalorder %s11, 0
    %p52 = por %p50, %p51
    %p53 = scmp.ne.s32.totalorder %s45, %s47
    %p54 = scmp.eq.s32.totalorder %s16, 1
    %p55 = por %p53, %p54
    %p56 = scmp.ne.s32.totalorder %s47, %s48
    %p57 = scmp.eq.s32.totalorder %s16, 0
    %p58 = por %p56, %p57
    %p59 = scmp.ne.s32.totalorder %s47, %s48
    %p60 = scmp.eq.s32.totalorder %s17, 1
    %p61 = por %p59, %p60
    %p63 = scmp.ne.s32.totalorder %s48, %s62
    %p64 = scmp.eq.s32.totalorder %s17, 0
    %p65 = por %p63, %p64
    %s67 = sadd.s32 %s66, 1
    %p70 = scmp.eq.s32.totalorder %s11, 1
    %p71 = scmp.ne.s32.totalorder %s66, %s68
    %p72 = scmp.eq.s32.totalorder %s11, 0
    %p73 = por %p71, %p72
    %p74 = scmp.ne.s32.totalorder %s66, %s68
    %p75 = scmp.eq.s32.totalorder %s16, 1
    %p76 = por %p74, %p75
    %p77 = scmp.ne.s32.totalorder %s68, %s69
    %p78 = scmp.eq.s32.totalorder %s16, 0
    %p79 = por %p77, %p78
    %p80 = scmp.ne.s32.totalorder %s68, %s69
    %p81 = scmp.eq.s32.totalorder %s17, 1
    %p82 = por %p80, %p81
    %p84 = scmp.ne.s32.totalorder %s69, %s83
    %p85 = scmp.eq.s32.totalorder %s17, 0
    %p86 = por %p84, %p85
    %s88 = sadd.s32 %s87, 1
    %p91 = scmp.eq.s32.totalorder %s11, 1
    %p92 = scmp.ne.s32.totalorder %s87, %s89
    %p93 = scmp.eq.s32.totalorder %s11, 0
    %p94 = por %p92, %p93
    %p95 = scmp.ne.s32.totalorder %s87, %s89
    %p96 = scmp.eq.s32.totalorder %s16, 1
    %p97 = por %p95, %p96
    %p98 = scmp.ne.s32.totalorder %s89, %s90
    %p99 = scmp.eq.s32.totalorder %s16, 0
    %p100 = por %p98, %p99
    %p101 = scmp.ne.s32.totalorder %s89, %s90
    %p102 = scmp.eq.s32.totalorder %s17, 1
    %p103 = por %p101, %p102
    %p105 = scmp.ne.s32.totalorder %s90, %s104
    %p106 = scmp.eq.s32.totalorder %s17, 0
    %p107 = por %p105, %p106
    %s109 = sadd.s32 %s108, 1
    %p112 = scmp.eq.s32.totalorder %s11, 1
    %p113 = scmp.ne.s32.totalorder %s108, %s110
    %p114 = scmp.eq.s32.totalorder %s11, 0
    %p115 = por %p113, %p114
    %p116 = scmp.ne.s32.totalorder %s108, %s110
    %p117 = scmp.eq.s32.totalorder %s16, 1
    %p118 = por %p116, %p117
    %p119 = scmp.ne.s32.totalorder %s110, %s111
    %p120 = scmp.eq.s32.totalorder %s16, 0
    %p121 = por %p119, %p120
    %p122 = scmp.ne.s32.totalorder %s110, %s111
    %p123 = scmp.eq.s32.totalorder %s17, 1
    %p124 = por %p122, %p123
    %p126 = scmp.ne.s32.totalorder %s111, %s125
    %p127 = scmp.eq.s32.totalorder %s17, 0
    %p128 = por %p126, %p127
    %s129 = ssub.s32 %s11, %s18
    %p130 = scmp.eq.s32.totalorder %s129, 0
    %s132 = sadd.s32 %s131, 1
    %s133 = scalar_select %p130, %s131, %s132
    %p136 = pneg %p130
    %p137 = scmp.eq.s32.totalorder %s11, 1
    %p138 = por %p136, %p137
    %p139 = scmp.ne.s32.totalorder %s131, %s134
    %p140 = scmp.eq.s32.totalorder %s11, 0
    %p141 = por %p139, %p140
    %p142 = scmp.ne.s32.totalorder %s131, %s134
    %p143 = scmp.eq.s32.totalorder %s16, 1
    %p144 = por %p142, %p143
    %p145 = scmp.ne.s32.totalorder %s134, %s135
    %p146 = scmp.eq.s32.totalorder %s16, 0
    %p147 = por %p145, %p146
    %p148 = scmp.ne.s32.totalorder %s134, %s135
    %p149 = scmp.eq.s32.totalorder %s17, 1
    %p150 = por %p148, %p149
    %p152 = scmp.ne.s32.totalorder %s135, %s151
    %p153 = scmp.eq.s32.totalorder %s17, 0
    %p154 = por %p152, %p153
    %p155 = scmp.le.s32.totalorder 1, %s11
    %p156 = scmp.lt.s32.totalorder %s11, 3
    %p157 = pnand %p155, %p156
    %p158 = pneg %p157
    // Predicated region
    $region9: #{_lambda_.1} parent=5 // pred_check
      _
    $region10: #{_lambda_.1} parent=5 // pred_check_branch
      %160 = sbr.rel (%p157) target = $region12
    $region11: #{_lambda_.1} parent=5 // pred_region
      %s161 = ssub.s32 %s11, 1
      // Predicated region
      $region13: #{_lambda_.1} parent=11 // pred_check
        %p162 = pneg %p58
      $region14: #{_lambda_.1} parent=11 // pred_check_branch
        %164 = sbr.rel (%p162) target = $region16
      $region15: #{_lambda_.1} parent=11 // pred_region
        _
      $region16: #{_lambda_.1} parent=11 // pred_fallthru
        _
      // Predicated region
      $region17: #{_lambda_.1} parent=11 // pred_check
        %p165 = pneg %p79
      $region18: #{_lambda_.1} parent=11 // pred_check_branch
        %167 = sbr.rel (%p165) target = $region20
      $region19: #{_lambda_.1} parent=11 // pred_region
        _
      $region20: #{_lambda_.1} parent=11 // pred_fallthru
        _
      // Predicated region
      $region21: #{_lambda_.1} parent=11 // pred_check
        %p168 = pneg %p100
      $region22: #{_lambda_.1} parent=11 // pred_check_branch
        %170 = sbr.rel (%p168) target = $region24
      $region23: #{_lambda_.1} parent=11 // pred_region
        _
      $region24: #{_lambda_.1} parent=11 // pred_fallthru
        _
      // Predicated region
      $region25: #{_lambda_.1} parent=11 // pred_check
        %p171 = pneg %p121
      $region26: #{_lambda_.1} parent=11 // pred_check_branch
        %173 = sbr.rel (%p171) target = $region28
      $region27: #{_lambda_.1} parent=11 // pred_region
        _
      $region28: #{_lambda_.1} parent=11 // pred_fallthru
        _
    $region12: #{_lambda_.1} parent=5 // pred_fallthru
      _
    %p174 = scmp.lt.s32.totalorder %s11, 2
    // Predicated region
    $region29: #{_lambda_.1} parent=5 // pred_check
      %p175 = pneg %p174
    $region30: #{_lambda_.1} parent=5 // pred_check_branch
      %177 = sbr.rel (%p175) target = $region32
    $region31: #{_lambda_.1} parent=5 // pred_region
      // Predicated region
      $region33: #{_lambda_.1} parent=31 // pred_check
        %p178 = pneg %p31
      $region34: #{_lambda_.1} parent=31 // pred_check_branch
        %180 = sbr.rel (%p178) target = $region36
      $region35: #{_lambda_.1} parent=31 // pred_region
        %p181 = scmp.lt.s32.totalorder %s11, 1
        %s182 = scalar_select %p181, %s11, 1
        %s183 = smul.addr %s182, 36
        %s184 = smul.addr %s183, 4
        %s185 = scalar_lea.vmem %s0, %s184
      $region36: #{_lambda_.1} parent=31 // pred_fallthru
        _
    $region32: #{_lambda_.1} parent=5 // pred_fallthru
      _
    %p186 = scmp.le.s32.totalorder 1, %s11
    %p187 = scmp.lt.s32.totalorder %s11, 3
    %p188 = pnand %p186, %p187
    %p189 = pneg %p188
    // Predicated region
    $region37: #{_lambda_.1} parent=5 // pred_check
      _
    $region38: #{_lambda_.1} parent=5 // pred_check_branch
      %191 = sbr.rel (%p188) target = $region40
    $region39: #{_lambda_.1} parent=5 // pred_region
      %s192 = ssub.s32 %s11, 1
      %p193 = scmp.lt.s32.totalorder %s16, 1
      %s194 = scalar_select %p193, %s16, 1
      %s195 = smul.addr %s194, 36
      %s196 = smul.addr %s195, 4
      %s197 = scalar_lea.vmem %s0, %s196
      %p198 = pneg %p37
      %p199 = pneg %p34
      %p200 = pneg %p58
      %p201 = pneg %p55
      %p202 = pneg %p79
      %p203 = pneg %p76
      %p204 = pneg %p100
      %p205 = pneg %p97
      %p206 = pneg %p121
      %p207 = pneg %p118
      %p208 = pneg %p147
      %p209 = pneg %p144
      %p210 = scmp.lt.s32.totalorder %s16, 1
      %s211 = scalar_select %p210, %s16, 1
      %s212 = smul.addr %s211, 8
      %s213 = smul.addr %s212, 8
      %s214 = scalar_lea.vmem %s5, %s213
      %p215 = scmp.lt.s32.totalorder %s16, 1
      %s216 = scalar_select %p215, %s16, 1
      %s217 = smul.addr %s216, 36
      %s218 = smul.addr %s217, 4
      %s219 = scalar_lea.vmem %s0, %s218
      %p220 = scmp.lt.s32.totalorder %s16, 1
      %s221 = scalar_select %p220, %s16, 1
      %s222 = smul.addr %s221, 8
      %s223 = smul.addr %s222, 8
      %s224 = scalar_lea.vmem %s5, %s223
      %v225 = vld [vmem:[%s2] sm:$0x3]
      %v227 = vlaneseq
      %v228 = vshrl.u32 %v227, 7
      %v229 = vsub.s32 0, %v228
      %v230 = vrot.slane %v225, %v229
      %v231 = vlaneseq
      %v232 = vshrl.u32 %v231, 7
      %v233 = vsub.s32 1, %v232
      %v234 = vrot.slane %v225, %v233
      %v237 = vld [vmem:[%s219] sm:$0xff]
      %v238 = vld [vmem:[%s219 + $0x8] sm:$0xf]
      %v239 = vld [vmem:[%s219 + $0xc] sm:$0xff]
      %v240 = vld [vmem:[%s219 + $0x14] sm:$0xf]
      %v241 = vunpack.c.l.bf16 %v237
      %v242 = vunpack.c.h.bf16 %v237
      %v243 = vunpack.c.l.bf16 %v238
      %v244 = vunpack.c.l.bf16 %v239
      %v245 = vunpack.c.h.bf16 %v239
      %v246 = vunpack.c.l.bf16 %v240
      %v247 = vld [vmem:[%s1] ss:$8 sm:$0x3]
      %v249 = vlaneseq
      %v250 = vshrl.u32 %v249, 7
      %v251 = vsub.s32 0, %v250
      %v252 = vrot.slane %v247, %v251
      %v253 = vlaneseq
      %v254 = vshrl.u32 %v253, 7
      %v255 = vsub.s32 1, %v254
      %v256 = vrot.slane %v247, %v255
      %v259 = vmul.f32 %v241, %v252
      %v260 = vmul.f32 %v242, %v256
      %v261 = vmul.f32 %v244, %v252
      %v262 = vmul.f32 %v245, %v256
      %v263 = vadd.f32 %v230, %v259
      %v264 = vadd.f32 %v234, %v260
      %v265 = vadd.f32 %v230, %v261
      %v266 = vadd.f32 %v234, %v262
      %s267 = scalar_lea.vmem %s1, 2
      %v268 = vld [vmem:[%s267] ss:$8 sm:$0x3]
      %v270 = vlaneseq
      %v271 = vshrl.u32 %v270, 7
      %v272 = vsub.s32 0, %v271
      %v273 = vrot.slane %v268, %v272
      %v274 = vlaneseq
      %v275 = vshrl.u32 %v274, 7
      %v276 = vsub.s32 1, %v275
      %v277 = vrot.slane %v268, %v276
      %278 = vrot.lane.b32.xlu0 %v273, 16
      %v279 = vpop.permute.xlu0 %278
      %280 = vrot.lane.b32.xlu0 %v277, 16
      %v281 = vpop.permute.xlu0 %280
      %vm282 = vcmask 130048
      %v283 = vsel %vm282, %v279, %v281
      %v287 = vmul.f32 %v241, %v279
      %v288 = vmul.f32 %v242, %v283
      %v289 = vmul.f32 %v243, %v281
      %v290 = vmul.f32 %v244, %v279
      %v291 = vmul.f32 %v245, %v283
      %v292 = vmul.f32 %v246, %v281
      %299 = vrot.lane.b32.xlu0 %v287, 112
      %v300 = vpop.permute.xlu0 %299
      %301 = vrot.lane.b32.xlu0 %v288, 112
      %v302 = vpop.permute.xlu0 %301
      %303 = vrot.lane.b32.xlu0 %v289, 112
      %v304 = vpop.permute.xlu0 %303
      %305 = vrot.lane.b32.xlu0 %v290, 112
      %v306 = vpop.permute.xlu0 %305
      %307 = vrot.lane.b32.xlu0 %v291, 112
      %v308 = vpop.permute.xlu0 %307
      %309 = vrot.lane.b32.xlu0 %v292, 112
      %v310 = vpop.permute.xlu0 %309
      %vm311 = vcmask 916480
      %v312 = vsel %vm311, %v300, %v302
      %v313 = vsel %vm311, %v302, %v304
      %v314 = vsel %vm311, %v306, %v308
      %v315 = vsel %vm311, %v308, %v310
      %v320 = vadd.f32 %v263, %v312
      %v321 = vadd.f32 %v264, %v313
      %v322 = vadd.f32 %v265, %v314
      %v323 = vadd.f32 %v266, %v315
      %s324 = scalar_lea.vmem %s219, 36
      %v325 = vld [vmem:[%s324] sm:$0xff]
      %v326 = vld [vmem:[%s324 + $0x8] sm:$0xf]
      %v327 = vld [vmem:[%s324 + $0xc] sm:$0xff]
      %v328 = vld [vmem:[%s324 + $0x14] sm:$0xf]
      %v329 = vunpack.c.l.bf16 %v325
      %v330 = vunpack.c.h.bf16 %v325
      %v331 = vunpack.c.l.bf16 %v326
      %v332 = vunpack.c.l.bf16 %v327
      %v333 = vunpack.c.h.bf16 %v327
      %v334 = vunpack.c.l.bf16 %v328
      %s335 = scalar_lea.vmem %s1, 1
      %v336 = vld [vmem:[%s335] ss:$8 sm:$0x3]
      %v338 = vlaneseq
      %v339 = vshrl.u32 %v338, 7
      %v340 = vsub.s32 0, %v339
      %v341 = vrot.slane %v336, %v340
      %v342 = vlaneseq
      %v343 = vshrl.u32 %v342, 7
      %v344 = vsub.s32 1, %v343
      %v345 = vrot.slane %v336, %v344
      %v348 = vmul.f32 %v329, %v341
      %v349 = vmul.f32 %v330, %v345
      %v350 = vmul.f32 %v332, %v341
      %v351 = vmul.f32 %v333, %v345
      %v352 = vadd.f32 %v320, %v348
      %v353 = vadd.f32 %v321, %v349
      %v354 = vadd.f32 %v322, %v350
      %v355 = vadd.f32 %v323, %v351
      %s356 = scalar_lea.vmem %s1, 3
      %v357 = vld [vmem:[%s356] ss:$8 sm:$0x3]
      %v359 = vlaneseq
      %v360 = vshrl.u32 %v359, 7
      %v361 = vsub.s32 0, %v360
      %v362 = vrot.slane %v357, %v361
      %v363 = vlaneseq
      %v364 = vshrl.u32 %v363, 7
      %v365 = vsub.s32 1, %v364
      %v366 = vrot.slane %v357, %v365
      %367 = vrot.lane.b32.xlu0 %v362, 16
      %v368 = vpop.permute.xlu0 %367
      %369 = vrot.lane.b32.xlu0 %v366, 16
      %v370 = vpop.permute.xlu0 %369
      %v371 = vsel %vm282, %v368, %v370
      %v375 = vmul.f32 %v329, %v368
      %v376 = vmul.f32 %v330, %v371
      %v377 = vmul.f32 %v331, %v370
      %v378 = vmul.f32 %v332, %v368
      %v379 = vmul.f32 %v333, %v371
      %v380 = vmul.f32 %v334, %v370
      %387 = vrot.lane.b32.xlu0 %v375, 112
      %v388 = vpop.permute.xlu0 %387
      %389 = vrot.lane.b32.xlu0 %v376, 112
      %v390 = vpop.permute.xlu0 %389
      %391 = vrot.lane.b32.xlu0 %v377, 112
      %v392 = vpop.permute.xlu0 %391
      %393 = vrot.lane.b32.xlu0 %v378, 112
      %v394 = vpop.permute.xlu0 %393
      %395 = vrot.lane.b32.xlu0 %v379, 112
      %v396 = vpop.permute.xlu0 %395
      %397 = vrot.lane.b32.xlu0 %v380, 112
      %v398 = vpop.permute.xlu0 %397
      %v399 = vsel %vm311, %v388, %v390
      %v400 = vsel %vm311, %v390, %v392
      %v401 = vsel %vm311, %v394, %v396
      %v402 = vsel %vm311, %v396, %v398
      %v407 = vadd.f32 %v352, %v399
      %v408 = vadd.f32 %v353, %v400
      %v409 = vadd.f32 %v354, %v401
      %v410 = vadd.f32 %v355, %v402
      %s411 = scalar_lea.vmem %s219, 72
      %v412 = vld [vmem:[%s411] sm:$0xff]
      %v413 = vld [vmem:[%s411 + $0x8] sm:$0xf]
      %v414 = vld [vmem:[%s411 + $0xc] sm:$0xff]
      %v415 = vld [vmem:[%s411 + $0x14] sm:$0xf]
      %v416 = vunpack.c.l.bf16 %v412
      %v417 = vunpack.c.h.bf16 %v412
      %v418 = vunpack.c.l.bf16 %v413
      %v419 = vunpack.c.l.bf16 %v414
      %v420 = vunpack.c.h.bf16 %v414
      %v421 = vunpack.c.l.bf16 %v415
      %s422 = scalar_lea.vmem %s1, 4
      %v423 = vld [vmem:[%s422] ss:$8 sm:$0x3]
      %v425 = vlaneseq
      %v426 = vshrl.u32 %v425, 7
      %v427 = vsub.s32 0, %v426
      %v428 = vrot.slane %v423, %v427
      %v429 = vlaneseq
      %v430 = vshrl.u32 %v429, 7
      %v431 = vsub.s32 1, %v430
      %v432 = vrot.slane %v423, %v431
      %v435 = vmul.f32 %v416, %v428
      %v436 = vmul.f32 %v417, %v432
      %v437 = vmul.f32 %v419, %v428
      %v438 = vmul.f32 %v420, %v432
      %v439 = vadd.f32 %v407, %v435
      %v440 = vadd.f32 %v408, %v436
      %v441 = vadd.f32 %v409, %v437
      %v442 = vadd.f32 %v410, %v438
      %s443 = scalar_lea.vmem %s1, 6
      %v444 = vld [vmem:[%s443] ss:$8 sm:$0x3]
      %v446 = vlaneseq
      %v447 = vshrl.u32 %v446, 7
      %v448 = vsub.s32 0, %v447
      %v449 = vrot.slane %v444, %v448
      %v450 = vlaneseq
      %v451 = vshrl.u32 %v450, 7
      %v452 = vsub.s32 1, %v451
      %v453 = vrot.slane %v444, %v452
      %454 = vrot.lane.b32.xlu0 %v449, 16
      %v455 = vpop.permute.xlu0 %454
      %456 = vrot.lane.b32.xlu0 %v453, 16
      %v457 = vpop.permute.xlu0 %456
      %v458 = vsel %vm282, %v455, %v457
      %v462 = vmul.f32 %v416, %v455
      %v463 = vmul.f32 %v417, %v458
      %v464 = vmul.f32 %v418, %v457
      %v465 = vmul.f32 %v419, %v455
      %v466 = vmul.f32 %v420, %v458
      %v467 = vmul.f32 %v421, %v457
      %474 = vrot.lane.b32.xlu0 %v462, 112
      %v475 = vpop.permute.xlu0 %474
      %476 = vrot.lane.b32.xlu0 %v463, 112
      %v477 = vpop.permute.xlu0 %476
      %478 = vrot.lane.b32.xlu0 %v464, 112
      %v479 = vpop.permute.xlu0 %478
      %480 = vrot.lane.b32.xlu0 %v465, 112
      %v481 = vpop.permute.xlu0 %480
      %482 = vrot.lane.b32.xlu0 %v466, 112
      %v483 = vpop.permute.xlu0 %482
      %484 = vrot.lane.b32.xlu0 %v467, 112
      %v485 = vpop.permute.xlu0 %484
      %v486 = vsel %vm311, %v475, %v477
      %v487 = vsel %vm311, %v477, %v479
      %v488 = vsel %vm311, %v481, %v483
      %v489 = vsel %vm311, %v483, %v485
      %v494 = vadd.f32 %v439, %v486
      %v495 = vadd.f32 %v440, %v487
      %v496 = vadd.f32 %v441, %v488
      %v497 = vadd.f32 %v442, %v489
      %s498 = scalar_lea.vmem %s219, 108
      %v499 = vld [vmem:[%s498] sm:$0xff]
      %v500 = vld [vmem:[%s498 + $0x8] sm:$0xf]
      %v501 = vld [vmem:[%s498 + $0xc] sm:$0xff]
      %v502 = vld [vmem:[%s498 + $0x14] sm:$0xf]
      %v503 = vunpack.c.l.bf16 %v499
      %v504 = vunpack.c.h.bf16 %v499
      %v505 = vunpack.c.l.bf16 %v500
      %v506 = vunpack.c.l.bf16 %v501
      %v507 = vunpack.c.h.bf16 %v501
      %v508 = vunpack.c.l.bf16 %v502
      %s509 = scalar_lea.vmem %s1, 5
      %v510 = vld [vmem:[%s509] ss:$8 sm:$0x3]
      %v512 = vlaneseq
      %v513 = vshrl.u32 %v512, 7
      %v514 = vsub.s32 0, %v513
      %v515 = vrot.slane %v510, %v514
      %v516 = vlaneseq
      %v517 = vshrl.u32 %v516, 7
      %v518 = vsub.s32 1, %v517
      %v519 = vrot.slane %v510, %v518
      %v522 = vmul.f32 %v503, %v515
      %v523 = vmul.f32 %v504, %v519
      %v524 = vmul.f32 %v506, %v515
      %v525 = vmul.f32 %v507, %v519
      %v526 = vadd.f32 %v494, %v522
      %v527 = vadd.f32 %v495, %v523
      %v528 = vadd.f32 %v496, %v524
      %v529 = vadd.f32 %v497, %v525
      %s530 = scalar_lea.vmem %s1, 7
      %v531 = vld [vmem:[%s530] ss:$8 sm:$0x3]
      %v533 = vlaneseq
      %v534 = vshrl.u32 %v533, 7
      %v535 = vsub.s32 0, %v534
      %v536 = vrot.slane %v531, %v535
      %v537 = vlaneseq
      %v538 = vshrl.u32 %v537, 7
      %v539 = vsub.s32 1, %v538
      %v540 = vrot.slane %v531, %v539
      %541 = vrot.lane.b32.xlu0 %v536, 16
      %v542 = vpop.permute.xlu0 %541
      %543 = vrot.lane.b32.xlu0 %v540, 16
      %v544 = vpop.permute.xlu0 %543
      %v545 = vsel %vm282, %v542, %v544
      %v549 = vmul.f32 %v503, %v542
      %v550 = vmul.f32 %v504, %v545
      %v551 = vmul.f32 %v505, %v544
      %v552 = vmul.f32 %v506, %v542
      %v553 = vmul.f32 %v507, %v545
      %v554 = vmul.f32 %v508, %v544
      %561 = vrot.lane.b32.xlu0 %v549, 112
      %v562 = vpop.permute.xlu0 %561
      %563 = vrot.lane.b32.xlu0 %v550, 112
      %v564 = vpop.permute.xlu0 %563
      %565 = vrot.lane.b32.xlu0 %v551, 112
      %v566 = vpop.permute.xlu0 %565
      %567 = vrot.lane.b32.xlu0 %v552, 112
      %v568 = vpop.permute.xlu0 %567
      %569 = vrot.lane.b32.xlu0 %v553, 112
      %v570 = vpop.permute.xlu0 %569
      %571 = vrot.lane.b32.xlu0 %v554, 112
      %v572 = vpop.permute.xlu0 %571
      %v573 = vsel %vm311, %v562, %v564
      %v574 = vsel %vm311, %v564, %v566
      %v575 = vsel %vm311, %v568, %v570
      %v576 = vsel %vm311, %v570, %v572
      %v581 = vadd.f32 %v526, %v573
      %v582 = vadd.f32 %v527, %v574
      %v583 = vadd.f32 %v528, %v575
      %v584 = vadd.f32 %v529, %v576
      %v585 = vld [vmem:[%s219 + $0x18] sm:$0x11]
      %v586 = vld [vmem:[%s219 + $0x20] sm:$0x1]
      %v587 = vunpack.c.l.bf16 %v585
      %v588 = vunpack.c.h.bf16 %v585
      %v589 = vunpack.c.l.bf16 %v586
      %s590 = scalar_lea.vmem %s1, 16
      %v591 = vld [vmem:[%s590] ss:$8 sm:$0x3]
      %v593 = vlaneseq
      %v594 = vshrl.u32 %v593, 7
      %v595 = vsub.s32 0, %v594
      %v596 = vrot.slane %v591, %v595
      %v597 = vlaneseq
      %v598 = vshrl.u32 %v597, 7
      %v599 = vsub.s32 1, %v598
      %v600 = vrot.slane %v591, %v599
      %v603 = vmul.f32 %v241, %v596
      %v604 = vmul.f32 %v242, %v600
      %v605 = vmul.f32 %v244, %v596
      %v606 = vmul.f32 %v245, %v600
      %v607 = vmul.f32 %v587, %v596
      %v608 = vmul.f32 %v588, %v600
      %vm615 = vcmask 1046528
      %v616 = vrot.slane %v603, 1
      %v617 = vrot.slane %v605, 1
      %v618 = vsel %vm615, %v616, %v617
      %v619 = vrot.slane %v604, 1
      %v620 = vrot.slane %v606, 1
      %v621 = vsel %vm615, %v619, %v620
      %v622 = vrot.slane %v607, 1
      %v623 = vsel %vm615, %v617, %v622
      %v624 = vrot.slane %v608, 1
      %v625 = vsel %vm615, %v620, %v624
      %v630 = vadd.f32 %v581, %v618
      %v631 = vadd.f32 %v582, %v621
      %v632 = vadd.f32 %v583, %v623
      %v633 = vadd.f32 %v584, %v625
      %s634 = scalar_lea.vmem %s1, 18
      %v635 = vld [vmem:[%s634] ss:$8 sm:$0x3]
      %v637 = vlaneseq
      %v638 = vshrl.u32 %v637, 7
      %v639 = vsub.s32 0, %v638
      %v640 = vrot.slane %v635, %v639
      %v641 = vlaneseq
      %v642 = vshrl.u32 %v641, 7
      %v643 = vsub.s32 1, %v642
      %v644 = vrot.slane %v635, %v643
      %645 = vrot.lane.b32.xlu0 %v640, 16
      %v646 = vpop.permute.xlu0 %645
      %647 = vrot.lane.b32.xlu0 %v644, 16
      %v648 = vpop.permute.xlu0 %647
      %v649 = vsel %vm282, %v646, %v648
      %v653 = vmul.f32 %v241, %v646
      %v654 = vmul.f32 %v242, %v649
      %v655 = vmul.f32 %v243, %v648
      %v656 = vmul.f32 %v244, %v646
      %v657 = vmul.f32 %v245, %v649
      %v658 = vmul.f32 %v246, %v648
      %v659 = vmul.f32 %v587, %v646
      %v660 = vmul.f32 %v588, %v649
      %v661 = vmul.f32 %v589, %v648
      %v671 = vrot.slane %v653, 1
      %v672 = vrot.slane %v656, 1
      %v673 = vsel %vm615, %v671, %v672
      %v674 = vrot.slane %v654, 1
      %v675 = vrot.slane %v657, 1
      %v676 = vsel %vm615, %v674, %v675
      %v677 = vrot.slane %v655, 1
      %v678 = vrot.slane %v658, 1
      %v679 = vsel %vm615, %v677, %v678
      %v680 = vrot.slane %v659, 1
      %v681 = vsel %vm615, %v672, %v680
      %v682 = vrot.slane %v660, 1
      %v683 = vsel %vm615, %v675, %v682
      %v684 = vrot.slane %v661, 1
      %v685 = vsel %vm615, %v678, %v684
      %686 = vrot.lane.b32.xlu0 %v673, 112
      %v687 = vpop.permute.xlu0 %686
      %688 = vrot.lane.b32.xlu0 %v676, 112
      %v689 = vpop.permute.xlu0 %688
      %690 = vrot.lane.b32.xlu0 %v679, 112
      %v691 = vpop.permute.xlu0 %690
      %692 = vrot.lane.b32.xlu0 %v681, 112
      %v693 = vpop.permute.xlu0 %692
      %694 = vrot.lane.b32.xlu0 %v683, 112
      %v695 = vpop.permute.xlu0 %694
      %696 = vrot.lane.b32.xlu0 %v685, 112
      %v697 = vpop.permute.xlu0 %696
      %v698 = vsel %vm311, %v687, %v689
      %v699 = vsel %vm311, %v689, %v691
      %v700 = vsel %vm311, %v693, %v695
      %v701 = vsel %vm311, %v695, %v697
      %v706 = vadd.f32 %v630, %v698
      %v707 = vadd.f32 %v631, %v699
      %v708 = vadd.f32 %v632, %v700
      %v709 = vadd.f32 %v633, %v701
      %v710 = vld [vmem:[%s324 + $0x18] sm:$0x11]
      %v711 = vld [vmem:[%s324 + $0x20] sm:$0x1]
      %v712 = vunpack.c.l.bf16 %v710
      %v713 = vunpack.c.h.bf16 %v710
      %v714 = vunpack.c.l.bf16 %v711
      %s715 = scalar_lea.vmem %s1, 17
      %v716 = vld [vmem:[%s715] ss:$8 sm:$0x3]
      %v718 = vlaneseq
      %v719 = vshrl.u32 %v718, 7
      %v720 = vsub.s32 0, %v719
      %v721 = vrot.slane %v716, %v720
      %v722 = vlaneseq
      %v723 = vshrl.u32 %v722, 7
      %v724 = vsub.s32 1, %v723
      %v725 = vrot.slane %v716, %v724
      %v728 = vmul.f32 %v329, %v721
      %v729 = vmul.f32 %v330, %v725
      %v730 = vmul.f32 %v332, %v721
      %v731 = vmul.f32 %v333, %v725
      %v732 = vmul.f32 %v712, %v721
      %v733 = vmul.f32 %v713, %v725
      %v740 = vrot.slane %v728, 1
      %v741 = vrot.slane %v730, 1
      %v742 = vsel %vm615, %v740, %v741
      %v743 = vrot.slane %v729, 1
      %v744 = vrot.slane %v731, 1
      %v745 = vsel %vm615, %v743, %v744
      %v746 = vrot.slane %v732, 1
      %v747 = vsel %vm615, %v741, %v746
      %v748 = vrot.slane %v733, 1
      %v749 = vsel %vm615, %v744, %v748
      %v754 = vadd.f32 %v706, %v742
      %v755 = vadd.f32 %v707, %v745
      %v756 = vadd.f32 %v708, %v747
      %v757 = vadd.f32 %v709, %v749
      %s758 = scalar_lea.vmem %s1, 19
      %v759 = vld [vmem:[%s758] ss:$8 sm:$0x3]
      %v761 = vlaneseq
      %v762 = vshrl.u32 %v761, 7
      %v763 = vsub.s32 0, %v762
      %v764 = vrot.slane %v759, %v763
      %v765 = vlaneseq
      %v766 = vshrl.u32 %v765, 7
      %v767 = vsub.s32 1, %v766
      %v768 = vrot.slane %v759, %v767
      %769 = vrot.lane.b32.xlu0 %v764, 16
      %v770 = vpop.permute.xlu0 %769
      %771 = vrot.lane.b32.xlu0 %v768, 16
      %v772 = vpop.permute.xlu0 %771
      %v773 = vsel %vm282, %v770, %v772
      %v777 = vmul.f32 %v329, %v770
      %v778 = vmul.f32 %v330, %v773
      %v779 = vmul.f32 %v331, %v772
      %v780 = vmul.f32 %v332, %v770
      %v781 = vmul.f32 %v333, %v773
      %v782 = vmul.f32 %v334, %v772
      %v783 = vmul.f32 %v712, %v770
      %v784 = vmul.f32 %v713, %v773
      %v785 = vmul.f32 %v714, %v772
      %v795 = vrot.slane %v777, 1
      %v796 = vrot.slane %v780, 1
      %v797 = vsel %vm615, %v795, %v796
      %v798 = vrot.slane %v778, 1
      %v799 = vrot.slane %v781, 1
      %v800 = vsel %vm615, %v798, %v799
      %v801 = vrot.slane %v779, 1
      %v802 = vrot.slane %v782, 1
      %v803 = vsel %vm615, %v801, %v802
      %v804 = vrot.slane %v783, 1
      %v805 = vsel %vm615, %v796, %v804
      %v806 = vrot.slane %v784, 1
      %v807 = vsel %vm615, %v799, %v806
      %v808 = vrot.slane %v785, 1
      %v809 = vsel %vm615, %v802, %v808
      %810 = vrot.lane.b32.xlu0 %v797, 112
      %v811 = vpop.permute.xlu0 %810
      %812 = vrot.lane.b32.xlu0 %v800, 112
      %v813 = vpop.permute.xlu0 %812
      %814 = vrot.lane.b32.xlu0 %v803, 112
      %v815 = vpop.permute.xlu0 %814
      %816 = vrot.lane.b32.xlu0 %v805, 112
      %v817 = vpop.permute.xlu0 %816
      %818 = vrot.lane.b32.xlu0 %v807, 112
      %v819 = vpop.permute.xlu0 %818
      %820 = vrot.lane.b32.xlu0 %v809, 112
      %v821 = vpop.permute.xlu0 %820
      %v822 = vsel %vm311, %v811, %v813
      %v823 = vsel %vm311, %v813, %v815
      %v824 = vsel %vm311, %v817, %v819
      %v825 = vsel %vm311, %v819, %v821
      %v830 = vadd.f32 %v754, %v822
      %v831 = vadd.f32 %v755, %v823
      %v832 = vadd.f32 %v756, %v824
      %v833 = vadd.f32 %v757, %v825
      %v834 = vld [vmem:[%s411 + $0x18] sm:$0x11]
      %v835 = vld [vmem:[%s411 + $0x20] sm:$0x1]
      %v836 = vunpack.c.l.bf16 %v834
      %v837 = vunpack.c.h.bf16 %v834
      %v838 = vunpack.c.l.bf16 %v835
      %s839 = scalar_lea.vmem %s1, 20
      %v840 = vld [vmem:[%s839] ss:$8 sm:$0x3]
      %v842 = vlaneseq
      %v843 = vshrl.u32 %v842, 7
      %v844 = vsub.s32 0, %v843
      %v845 = vrot.slane %v840, %v844
      %v846 = vlaneseq
      %v847 = vshrl.u32 %v846, 7
      %v848 = vsub.s32 1, %v847
      %v849 = vrot.slane %v840, %v848
      %v852 = vmul.f32 %v416, %v845
      %v853 = vmul.f32 %v417, %v849
      %v854 = vmul.f32 %v419, %v845
      %v855 = vmul.f32 %v420, %v849
      %v856 = vmul.f32 %v836, %v845
      %v857 = vmul.f32 %v837, %v849
      %v864 = vrot.slane %v852, 1
      %v865 = vrot.slane %v854, 1
      %v866 = vsel %vm615, %v864, %v865
      %v867 = vrot.slane %v853, 1
      %v868 = vrot.slane %v855, 1
      %v869 = vsel %vm615, %v867, %v868
      %v870 = vrot.slane %v856, 1
      %v871 = vsel %vm615, %v865, %v870
      %v872 = vrot.slane %v857, 1
      %v873 = vsel %vm615, %v868, %v872
      %v878 = vadd.f32 %v830, %v866
      %v879 = vadd.f32 %v831, %v869
      %v880 = vadd.f32 %v832, %v871
      %v881 = vadd.f32 %v833, %v873
      %s882 = scalar_lea.vmem %s1, 22
      %v883 = vld [vmem:[%s882] ss:$8 sm:$0x3]
      %v885 = vlaneseq
      %v886 = vshrl.u32 %v885, 7
      %v887 = vsub.s32 0, %v886
      %v888 = vrot.slane %v883, %v887
      %v889 = vlaneseq
      %v890 = vshrl.u32 %v889, 7
      %v891 = vsub.s32 1, %v890
      %v892 = vrot.slane %v883, %v891
      %893 = vrot.lane.b32.xlu0 %v888, 16
      %v894 = vpop.permute.xlu0 %893
      %895 = vrot.lane.b32.xlu0 %v892, 16
      %v896 = vpop.permute.xlu0 %895
      %v897 = vsel %vm282, %v894, %v896
      %v901 = vmul.f32 %v416, %v894
      %v902 = vmul.f32 %v417, %v897
      %v903 = vmul.f32 %v418, %v896
      %v904 = vmul.f32 %v419, %v894
      %v905 = vmul.f32 %v420, %v897
      %v906 = vmul.f32 %v421, %v896
      %v907 = vmul.f32 %v836, %v894
      %v908 = vmul.f32 %v837, %v897
      %v909 = vmul.f32 %v838, %v896
      %v919 = vrot.slane %v901, 1
      %v920 = vrot.slane %v904, 1
      %v921 = vsel %vm615, %v919, %v920
      %v922 = vrot.slane %v902, 1
      %v923 = vrot.slane %v905, 1
      %v924 = vsel %vm615, %v922, %v923
      %v925 = vrot.slane %v903, 1
      %v926 = vrot.slane %v906, 1
      %v927 = vsel %vm615, %v925, %v926
      %v928 = vrot.slane %v907, 1
      %v929 = vsel %vm615, %v920, %v928
      %v930 = vrot.slane %v908, 1
      %v931 = vsel %vm615, %v923, %v930
      %v932 = vrot.slane %v909, 1
      %v933 = vsel %vm615, %v926, %v932
      %934 = vrot.lane.b32.xlu0 %v921, 112
      %v935 = vpop.permute.xlu0 %934
      %936 = vrot.lane.b32.xlu0 %v924, 112
      %v937 = vpop.permute.xlu0 %936
      %938 = vrot.lane.b32.xlu0 %v927, 112
      %v939 = vpop.permute.xlu0 %938
      %940 = vrot.lane.b32.xlu0 %v929, 112
      %v941 = vpop.permute.xlu0 %940
      %942 = vrot.lane.b32.xlu0 %v931, 112
      %v943 = vpop.permute.xlu0 %942
      %944 = vrot.lane.b32.xlu0 %v933, 112
      %v945 = vpop.permute.xlu0 %944
      %v946 = vsel %vm311, %v935, %v937
      %v947 = vsel %vm311, %v937, %v939
      %v948 = vsel %vm311, %v941, %v943
      %v949 = vsel %vm311, %v943, %v945
      %v954 = vadd.f32 %v878, %v946
      %v955 = vadd.f32 %v879, %v947
      %v956 = vadd.f32 %v880, %v948
      %v957 = vadd.f32 %v881, %v949
      %v958 = vld [vmem:[%s498 + $0x18] sm:$0x11]
      %v959 = vld [vmem:[%s498 + $0x20] sm:$0x1]
      %v960 = vunpack.c.l.bf16 %v958
      %v961 = vunpack.c.h.bf16 %v958
      %v962 = vunpack.c.l.bf16 %v959
      %s963 = scalar_lea.vmem %s1, 21
      %v964 = vld [vmem:[%s963] ss:$8 sm:$0x3]
      %v966 = vlaneseq
      %v967 = vshrl.u32 %v966, 7
      %v968 = vsub.s32 0, %v967
      %v969 = vrot.slane %v964, %v968
      %v970 = vlaneseq
      %v971 = vshrl.u32 %v970, 7
      %v972 = vsub.s32 1, %v971
      %v973 = vrot.slane %v964, %v972
      %v976 = vmul.f32 %v503, %v969
      %v977 = vmul.f32 %v504, %v973
      %v978 = vmul.f32 %v506, %v969
      %v979 = vmul.f32 %v507, %v973
      %v980 = vmul.f32 %v960, %v969
      %v981 = vmul.f32 %v961, %v973
      %v988 = vrot.slane %v976, 1
      %v989 = vrot.slane %v978, 1
      %v990 = vsel %vm615, %v988, %v989
      %v991 = vrot.slane %v977, 1
      %v992 = vrot.slane %v979, 1
      %v993 = vsel %vm615, %v991, %v992
      %v994 = vrot.slane %v980, 1
      %v995 = vsel %vm615, %v989, %v994
      %v996 = vrot.slane %v981, 1
      %v997 = vsel %vm615, %v992, %v996
      %v1002 = vadd.f32 %v954, %v990
      %v1003 = vadd.f32 %v955, %v993
      %v1004 = vadd.f32 %v956, %v995
      %v1005 = vadd.f32 %v957, %v997
      %s1006 = scalar_lea.vmem %s1, 23
      %v1007 = vld [vmem:[%s1006] ss:$8 sm:$0x3]
      %v1009 = vlaneseq
      %v1010 = vshrl.u32 %v1009, 7
      %v1011 = vsub.s32 0, %v1010
      %v1012 = vrot.slane %v1007, %v1011
      %v1013 = vlaneseq
      %v1014 = vshrl.u32 %v1013, 7
      %v1015 = vsub.s32 1, %v1014
      %v1016 = vrot.slane %v1007, %v1015
      %1017 = vrot.lane.b32.xlu0 %v1012, 16
      %v1018 = vpop.permute.xlu0 %1017
      %1019 = vrot.lane.b32.xlu0 %v1016, 16
      %v1020 = vpop.permute.xlu0 %1019
      %v1021 = vsel %vm282, %v1018, %v1020
      %v1025 = vmul.f32 %v503, %v1018
      %v1026 = vmul.f32 %v504, %v1021
      %v1027 = vmul.f32 %v505, %v1020
      %v1028 = vmul.f32 %v506, %v1018
      %v1029 = vmul.f32 %v507, %v1021
      %v1030 = vmul.f32 %v508, %v1020
      %v1031 = vmul.f32 %v960, %v1018
      %v1032 = vmul.f32 %v961, %v1021
      %v1033 = vmul.f32 %v962, %v1020
      %v1043 = vrot.slane %v1025, 1
      %v1044 = vrot.slane %v1028, 1
      %v1045 = vsel %vm615, %v1043, %v1044
      %v1046 = vrot.slane %v1026, 1
      %v1047 = vrot.slane %v1029, 1
      %v1048 = vsel %vm615, %v1046, %v1047
      %v1049 = vrot.slane %v1027, 1
      %v1050 = vrot.slane %v1030, 1
      %v1051 = vsel %vm615, %v1049, %v1050
      %v1052 = vrot.slane %v1031, 1
      %v1053 = vsel %vm615, %v1044, %v1052
      %v1054 = vrot.slane %v1032, 1
      %v1055 = vsel %vm615, %v1047, %v1054
      %v1056 = vrot.slane %v1033, 1
      %v1057 = vsel %vm615, %v1050, %v1056
      %1058 = vrot.lane.b32.xlu0 %v1045, 112
      %v1059 = vpop.permute.xlu0 %1058
      %1060 = vrot.lane.b32.xlu0 %v1048, 112
      %v1061 = vpop.permute.xlu0 %1060
      %1062 = vrot.lane.b32.xlu0 %v1051, 112
      %v1063 = vpop.permute.xlu0 %1062
      %1064 = vrot.lane.b32.xlu0 %v1053, 112
      %v1065 = vpop.permute.xlu0 %1064
      %1066 = vrot.lane.b32.xlu0 %v1055, 112
      %v1067 = vpop.permute.xlu0 %1066
      %1068 = vrot.lane.b32.xlu0 %v1057, 112
      %v1069 = vpop.permute.xlu0 %1068
      %v1070 = vsel %vm311, %v1059, %v1061
      %v1071 = vsel %vm311, %v1061, %v1063
      %v1072 = vsel %vm311, %v1065, %v1067
      %v1073 = vsel %vm311, %v1067, %v1069
      %v1078 = vadd.f32 %v1002, %v1070
      %v1079 = vadd.f32 %v1003, %v1071
      %v1080 = vadd.f32 %v1004, %v1072
      %v1081 = vadd.f32 %v1005, %v1073
      %v1082 = vpack.c.bf16 %v1080, %v1078
      %v1083 = vpack.c.bf16 %v1081, %v1079
      %v1084 = vld [vmem:[%s3] sm:$0xff]
      %v1085 = vld [vmem:[%s3 + $0x8] sm:$0xff]
      %v1086 = vld [vmem:[%s3 + $0x10] sm:$0xff]
      %v1087 = vld [vmem:[%s3 + $0x18] sm:$0xff]
      %v1088 = vld [vmem:[%s3 + $0x20] sm:$0xff]
      %v1089 = vld [vmem:[%s3 + $0x28] sm:$0xff]
      %v1090 = vld [vmem:[%s3 + $0x30] sm:$0xff]
      %v1091 = vld [vmem:[%s3 + $0x38] sm:$0xff]
      %v1092 = vld [vmem:[%s3 + $0x40] sm:$0xff]
      %v1093 = vld [vmem:[%s3 + $0x48] sm:$0xff]
      %v1094 = vld [vmem:[%s3 + $0x50] sm:$0xff]
      %v1095 = vld [vmem:[%s3 + $0x58] sm:$0xff]
      %v1096 = vld [vmem:[%s3 + $0x60] sm:$0xff]
      %v1097 = vld [vmem:[%s3 + $0x68] sm:$0xff]
      %v1098 = vld [vmem:[%s3 + $0x70] sm:$0xff]
      %v1099 = vld [vmem:[%s3 + $0x78] sm:$0xff]
      %v1100 = vld [vmem:[%s3 + $0x80] sm:$0xff]
      %v1101 = vld [vmem:[%s3 + $0x88] sm:$0xff]
      %v1102 = vld [vmem:[%s3 + $0x90] sm:$0xff]
      %v1103 = vld [vmem:[%s3 + $0x98] sm:$0xff]
      %v1104 = vld [vmem:[%s3 + $0xa0] sm:$0xff]
      %v1105 = vld [vmem:[%s3 + $0xa8] sm:$0xff]
      %v1106 = vld [vmem:[%s3 + $0xb0] sm:$0xff]
      %v1107 = vld [vmem:[%s3 + $0xb8] sm:$0xff]
      %v1108 = vld [vmem:[%s3 + $0xc0] sm:$0xff]
      %v1109 = vld [vmem:[%s3 + $0xc8] sm:$0xff]
      %v1110 = vld [vmem:[%s3 + $0xd0] sm:$0xff]
      %v1111 = vld [vmem:[%s3 + $0xd8] sm:$0xff]
      %v1112 = vld [vmem:[%s3 + $0xe0] sm:$0xff]
      %v1113 = vld [vmem:[%s3 + $0xe8] sm:$0xff]
      %v1114 = vld [vmem:[%s3 + $0xf0] sm:$0xff]
      %v1115 = vld [vmem:[%s3 + $0xf8] sm:$0xff]
      %v1116 = vld [vmem:[%s3 + $0x100] sm:$0xff]
      %v1117 = vld [vmem:[%s3 + $0x108] sm:$0xff]
      %v1118 = vld [vmem:[%s3 + $0x110] sm:$0xff]
      %v1119 = vld [vmem:[%s3 + $0x118] sm:$0xff]
      %v1120 = vld [vmem:[%s3 + $0x120] sm:$0xff]
      %v1121 = vld [vmem:[%s3 + $0x128] sm:$0xff]
      %v1122 = vld [vmem:[%s3 + $0x130] sm:$0xff]
      %v1123 = vld [vmem:[%s3 + $0x138] sm:$0xff]
      %v1124 = vld [vmem:[%s3 + $0x140] sm:$0xff]
      %v1125 = vld [vmem:[%s3 + $0x148] sm:$0xff]
      %v1126 = vld [vmem:[%s3 + $0x150] sm:$0xff]
      %v1127 = vld [vmem:[%s3 + $0x158] sm:$0xff]
      %v1128 = vld [vmem:[%s3 + $0x160] sm:$0xff]
      %v1129 = vld [vmem:[%s3 + $0x168] sm:$0xff]
      %v1130 = vld [vmem:[%s3 + $0x170] sm:$0xff]
      %v1131 = vld [vmem:[%s3 + $0x178] sm:$0xff]
      %v1132 = vld [vmem:[%s3 + $0x180] sm:$0xff]
      %v1133 = vld [vmem:[%s3 + $0x188] sm:$0xff]
      %v1134 = vld [vmem:[%s3 + $0x190] sm:$0xff]
      %v1135 = vld [vmem:[%s3 + $0x198] sm:$0xff]
      %v1136 = vld [vmem:[%s3 + $0x1a0] sm:$0xff]
      %v1137 = vld [vmem:[%s3 + $0x1a8] sm:$0xff]
      %v1138 = vld [vmem:[%s3 + $0x1b0] sm:$0xff]
      %v1139 = vld [vmem:[%s3 + $0x1b8] sm:$0xff]
      %v1140 = vld [vmem:[%s3 + $0x1c0] sm:$0xff]
      %v1141 = vld [vmem:[%s3 + $0x1c8] sm:$0xff]
      %v1142 = vld [vmem:[%s3 + $0x1d0] sm:$0xff]
      %v1143 = vld [vmem:[%s3 + $0x1d8] sm:$0xff]
      %v1144 = vld [vmem:[%s3 + $0x1e0] sm:$0xff]
      %v1145 = vld [vmem:[%s3 + $0x1e8] sm:$0xff]
      %v1146 = vld [vmem:[%s3 + $0x1f0] sm:$0xff]
      %v1147 = vld [vmem:[%s3 + $0x1f8] sm:$0xff]
      %v1148 = vld [vmem:[%s4] sm:$0xf]
      %v1150 = vlaneseq
      %v1151 = vshrl.u32 %v1150, 7
      %v1152 = vsub.s32 0, %v1151
      %v1153 = vrot.slane %v1148, %v1152
      %v1154 = vlaneseq
      %v1155 = vshrl.u32 %v1154, 7
      %v1156 = vsub.s32 1, %v1155
      %v1157 = vrot.slane %v1148, %v1156
      %v1158 = vlaneseq
      %v1159 = vshrl.u32 %v1158, 7
      %v1160 = vsub.s32 2, %v1159
      %v1161 = vrot.slane %v1148, %v1160
      %v1162 = vlaneseq
      %v1163 = vshrl.u32 %v1162, 7
      %v1164 = vsub.s32 3, %v1163
      %v1165 = vrot.slane %v1148, %v1164
      %v1234 = vunpack.c.l.b16 %v1084
      %v1235 = vunpack.c.h.b16 %v1084
      %v1236 = vunpack.c.l.b16 %v1085
      %v1237 = vunpack.c.h.b16 %v1085
      %v1238 = vunpack.c.l.b16 %v1086
      %v1239 = vunpack.c.h.b16 %v1086
      %v1240 = vunpack.c.l.b16 %v1087
      %v1241 = vunpack.c.h.b16 %v1087
      %v1242 = vunpack.c.l.b16 %v1088
      %v1243 = vunpack.c.h.b16 %v1088
      %v1244 = vunpack.c.l.b16 %v1089
      %v1245 = vunpack.c.h.b16 %v1089
      %v1246 = vunpack.c.l.b16 %v1090
      %v1247 = vunpack.c.h.b16 %v1090
      %v1248 = vunpack.c.l.b16 %v1091
      %v1249 = vunpack.c.h.b16 %v1091
      %v1250 = vunpack.c.l.b16 %v1092
      %v1251 = vunpack.c.h.b16 %v1092
      %v1252 = vunpack.c.l.b16 %v1093
      %v1253 = vunpack.c.h.b16 %v1093
      %v1254 = vunpack.c.l.b16 %v1094
      %v1255 = vunpack.c.h.b16 %v1094
      %v1256 = vunpack.c.l.b16 %v1095
      %v1257 = vunpack.c.h.b16 %v1095
      %v1258 = vunpack.c.l.b16 %v1096
      %v1259 = vunpack.c.h.b16 %v1096
      %v1260 = vunpack.c.l.b16 %v1097
      %v1261 = vunpack.c.h.b16 %v1097
      %v1262 = vunpack.c.l.b16 %v1098
      %v1263 = vunpack.c.h.b16 %v1098
      %v1264 = vunpack.c.l.b16 %v1099
      %v1265 = vunpack.c.h.b16 %v1099
      %v1266 = vunpack.c.l.b16 %v1100
      %v1267 = vunpack.c.h.b16 %v1100
      %v1268 = vunpack.c.l.b16 %v1101
      %v1269 = vunpack.c.h.b16 %v1101
      %v1270 = vunpack.c.l.b16 %v1102
      %v1271 = vunpack.c.h.b16 %v1102
      %v1272 = vunpack.c.l.b16 %v1103
      %v1273 = vunpack.c.h.b16 %v1103
      %v1274 = vunpack.c.l.b16 %v1104
      %v1275 = vunpack.c.h.b16 %v1104
      %v1276 = vunpack.c.l.b16 %v1105
      %v1277 = vunpack.c.h.b16 %v1105
      %v1278 = vunpack.c.l.b16 %v1106
      %v1279 = vunpack.c.h.b16 %v1106
      %v1280 = vunpack.c.l.b16 %v1107
      %v1281 = vunpack.c.h.b16 %v1107
      %v1282 = vunpack.c.l.b16 %v1108
      %v1283 = vunpack.c.h.b16 %v1108
      %v1284 = vunpack.c.l.b16 %v1109
      %v1285 = vunpack.c.h.b16 %v1109
      %v1286 = vunpack.c.l.b16 %v1110
      %v1287 = vunpack.c.h.b16 %v1110
      %v1288 = vunpack.c.l.b16 %v1111
      %v1289 = vunpack.c.h.b16 %v1111
      %v1290 = vunpack.c.l.b16 %v1112
      %v1291 = vunpack.c.h.b16 %v1112
      %v1292 = vunpack.c.l.b16 %v1113
      %v1293 = vunpack.c.h.b16 %v1113
      %v1294 = vunpack.c.l.b16 %v1114
      %v1295 = vunpack.c.h.b16 %v1114
      %v1296 = vunpack.c.l.b16 %v1115
      %v1297 = vunpack.c.h.b16 %v1115
      %v1298 = vunpack.c.l.b16 %v1116
      %v1299 = vunpack.c.h.b16 %v1116
      %v1300 = vunpack.c.l.b16 %v1117
      %v1301 = vunpack.c.h.b16 %v1117
      %v1302 = vunpack.c.l.b16 %v1118
      %v1303 = vunpack.c.h.b16 %v1118
      %v1304 = vunpack.c.l.b16 %v1119
      %v1305 = vunpack.c.h.b16 %v1119
      %v1306 = vunpack.c.l.b16 %v1120
      %v1307 = vunpack.c.h.b16 %v1120
      %v1308 = vunpack.c.l.b16 %v1121
      %v1309 = vunpack.c.h.b16 %v1121
      %v1310 = vunpack.c.l.b16 %v1122
      %v1311 = vunpack.c.h.b16 %v1122
      %v1312 = vunpack.c.l.b16 %v1123
      %v1313 = vunpack.c.h.b16 %v1123
      %v1314 = vunpack.c.l.b16 %v1124
      %v1315 = vunpack.c.h.b16 %v1124
      %v1316 = vunpack.c.l.b16 %v1125
      %v1317 = vunpack.c.h.b16 %v1125
      %v1318 = vunpack.c.l.b16 %v1126
      %v1319 = vunpack.c.h.b16 %v1126
      %v1320 = vunpack.c.l.b16 %v1127
      %v1321 = vunpack.c.h.b16 %v1127
      %v1322 = vunpack.c.l.b16 %v1128
      %v1323 = vunpack.c.h.b16 %v1128
      %v1324 = vunpack.c.l.b16 %v1129
      %v1325 = vunpack.c.h.b16 %v1129
      %v1326 = vunpack.c.l.b16 %v1130
      %v1327 = vunpack.c.h.b16 %v1130
      %v1328 = vunpack.c.l.b16 %v1131
      %v1329 = vunpack.c.h.b16 %v1131
      %v1330 = vunpack.c.l.b16 %v1132
      %v1331 = vunpack.c.h.b16 %v1132
      %v1332 = vunpack.c.l.b16 %v1133
      %v1333 = vunpack.c.h.b16 %v1133
      %v1334 = vunpack.c.l.b16 %v1134
      %v1335 = vunpack.c.h.b16 %v1134
      %v1336 = vunpack.c.l.b16 %v1135
      %v1337 = vunpack.c.h.b16 %v1135
      %v1338 = vunpack.c.l.b16 %v1136
      %v1339 = vunpack.c.h.b16 %v1136
      %v1340 = vunpack.c.l.b16 %v1137
      %v1341 = vunpack.c.h.b16 %v1137
      %v1342 = vunpack.c.l.b16 %v1138
      %v1343 = vunpack.c.h.b16 %v1138
      %v1344 = vunpack.c.l.b16 %v1139
      %v1345 = vunpack.c.h.b16 %v1139
      %v1346 = vunpack.c.l.b16 %v1140
      %v1347 = vunpack.c.h.b16 %v1140
      %v1348 = vunpack.c.l.b16 %v1141
      %v1349 = vunpack.c.h.b16 %v1141
      %v1350 = vunpack.c.l.b16 %v1142
      %v1351 = vunpack.c.h.b16 %v1142
      %v1352 = vunpack.c.l.b16 %v1143
      %v1353 = vunpack.c.h.b16 %v1143
      %v1354 = vunpack.c.l.b16 %v1144
      %v1355 = vunpack.c.h.b16 %v1144
      %v1356 = vunpack.c.l.b16 %v1145
      %v1357 = vunpack.c.h.b16 %v1145
      %v1358 = vunpack.c.l.b16 %v1146
      %v1359 = vunpack.c.h.b16 %v1146
      %v1360 = vunpack.c.l.b16 %v1147
      %v1361 = vunpack.c.h.b16 %v1147
      %v1362 = vpack.c.b16 %v1238, %v1234
      %v1363 = vpack.c.b16 %v1239, %v1235
      %v1364 = vpack.c.b16 %v1240, %v1236
      %v1365 = vpack.c.b16 %v1241, %v1237
      %v1366 = vpack.c.b16 %v1246, %v1242
      %v1367 = vpack.c.b16 %v1247, %v1243
      %v1368 = vpack.c.b16 %v1248, %v1244
      %v1369 = vpack.c.b16 %v1249, %v1245
      %v1370 = vpack.c.b16 %v1254, %v1250
      %v1371 = vpack.c.b16 %v1255, %v1251
      %v1372 = vpack.c.b16 %v1256, %v1252
      %v1373 = vpack.c.b16 %v1257, %v1253
      %v1374 = vpack.c.b16 %v1262, %v1258
      %v1375 = vpack.c.b16 %v1263, %v1259
      %v1376 = vpack.c.b16 %v1264, %v1260
      %v1377 = vpack.c.b16 %v1265, %v1261
      %v1378 = vpack.c.b16 %v1270, %v1266
      %v1379 = vpack.c.b16 %v1271, %v1267
      %v1380 = vpack.c.b16 %v1272, %v1268
      %v1381 = vpack.c.b16 %v1273, %v1269
      %v1382 = vpack.c.b16 %v1278, %v1274
      %v1383 = vpack.c.b16 %v1279, %v1275
      %v1384 = vpack.c.b16 %v1280, %v1276
      %v1385 = vpack.c.b16 %v1281, %v1277
      %v1386 = vpack.c.b16 %v1286, %v1282
      %v1387 = vpack.c.b16 %v1287, %v1283
      %v1388 = vpack.c.b16 %v1288, %v1284
      %v1389 = vpack.c.b16 %v1289, %v1285
      %v1390 = vpack.c.b16 %v1294, %v1290
      %v1391 = vpack.c.b16 %v1295, %v1291
      %v1392 = vpack.c.b16 %v1296, %v1292
      %v1393 = vpack.c.b16 %v1297, %v1293
      %v1394 = vpack.c.b16 %v1302, %v1298
      %v1395 = vpack.c.b16 %v1303, %v1299
      %v1396 = vpack.c.b16 %v1304, %v1300
      %v1397 = vpack.c.b16 %v1305, %v1301
      %v1398 = vpack.c.b16 %v1310, %v1306
      %v1399 = vpack.c.b16 %v1311, %v1307
      %v1400 = vpack.c.b16 %v1312, %v1308
      %v1401 = vpack.c.b16 %v1313, %v1309
      %v1402 = vpack.c.b16 %v1318, %v1314
      %v1403 = vpack.c.b16 %v1319, %v1315
      %v1404 = vpack.c.b16 %v1320, %v1316
      %v1405 = vpack.c.b16 %v1321, %v1317
      %v1406 = vpack.c.b16 %v1326, %v1322
      %v1407 = vpack.c.b16 %v1327, %v1323
      %v1408 = vpack.c.b16 %v1328, %v1324
      %v1409 = vpack.c.b16 %v1329, %v1325
      %v1410 = vpack.c.b16 %v1334, %v1330
      %v1411 = vpack.c.b16 %v1335, %v1331
      %v1412 = vpack.c.b16 %v1336, %v1332
      %v1413 = vpack.c.b16 %v1337, %v1333
      %v1414 = vpack.c.b16 %v1342, %v1338
      %v1415 = vpack.c.b16 %v1343, %v1339
      %v1416 = vpack.c.b16 %v1344, %v1340
      %v1417 = vpack.c.b16 %v1345, %v1341
      %v1418 = vpack.c.b16 %v1350, %v1346
      %v1419 = vpack.c.b16 %v1351, %v1347
      %v1420 = vpack.c.b16 %v1352, %v1348
      %v1421 = vpack.c.b16 %v1353, %v1349
      %v1422 = vpack.c.b16 %v1358, %v1354
      %v1423 = vpack.c.b16 %v1359, %v1355
      %v1424 = vpack.c.b16 %v1360, %v1356
      %v1425 = vpack.c.b16 %v1361, %v1357
      %1490 = vmatprep.subr.bf16.mxu0 %v1391
      %1491 = vmatpush1.bf16.msra.mxu0 %v1390
      %1492 = vmatprep.subr.bf16.mxu0 %v1387
      %1493 = vmatpush1.bf16.msra.mxu0 %v1386
      %1494 = vmatprep.subr.bf16.mxu0 %v1383
      %1495 = vmatpush1.bf16.msra.mxu0 %v1382
      %1496 = vmatprep.subr.bf16.mxu0 %v1379
      %1497 = vmatpush1.bf16.msra.mxu0 %v1378
      %1498 = vmatprep.subr.bf16.mxu0 %v1375
      %1499 = vmatpush1.bf16.msra.mxu0 %v1374
      %1500 = vmatprep.subr.bf16.mxu0 %v1371
      %1501 = vmatpush1.bf16.msra.mxu0 %v1370
      %1502 = vmatprep.subr.bf16.mxu0 %v1367
      %1503 = vmatpush1.bf16.msra.mxu0 %v1366
      %1504 = vmatprep.subr.bf16.mxu0 %v1363
      %1505 = vmatpush1.bf16.msra.mxu0 %v1362
      %1506 = vmatprep.subr.bf16.mxu0 %v1423
      %1507 = vmatpush2.bf16.msra.mxu0 %v1422
      %1508 = vmatprep.subr.bf16.mxu0 %v1419
      %1509 = vmatpush2.bf16.msra.mxu0 %v1418
      %1510 = vmatprep.subr.bf16.mxu0 %v1415
      %1511 = vmatpush2.bf16.msra.mxu0 %v1414
      %1512 = vmatprep.subr.bf16.mxu0 %v1411
      %1513 = vmatpush2.bf16.msra.mxu0 %v1410
      %1514 = vmatprep.subr.bf16.mxu0 %v1407
      %1515 = vmatpush2.bf16.msra.mxu0 %v1406
      %1516 = vmatprep.subr.bf16.mxu0 %v1403
      %1517 = vmatpush2.bf16.msra.mxu0 %v1402
      %1518 = vmatprep.subr.bf16.mxu0 %v1399
      %1519 = vmatpush2.bf16.msra.mxu0 %v1398
      %1520 = vmatprep.subr.bf16.mxu0 %v1395
      %1521 = vmatpush2.bf16.msra.mxu0 %v1394
      %1522 = vmatprep.mubr.bf16.mxu0 %v1083
      %1523 = vmatmul.mubr.bf16.gmra.mxu0 %v1082
      %v1524 = vpop.f32.mrf.mxu0
      %v1525 = vadd.f32 %v1153, %v1524
      %v1526 = vpop.f32.mrf.mxu0
      %v1527 = vadd.f32 %v1157, %v1526
      %v1528 = vpop.f32.mrf.mxu0
      %v1529 = vadd.f32 %v1153, %v1528
      %v1530 = vpop.f32.mrf.mxu0
      %v1531 = vadd.f32 %v1157, %v1530
      %1532 = vdwg.mxu0
      %1533 = vmatprep.subr.bf16.mxu0 %v1393
      %1534 = vmatpush1.bf16.msra.mxu0 %v1392
      %1535 = vmatprep.subr.bf16.mxu0 %v1389
      %1536 = vmatpush1.bf16.msra.mxu0 %v1388
      %1537 = vmatprep.subr.bf16.mxu0 %v1385
      %1538 = vmatpush1.bf16.msra.mxu0 %v1384
      %1539 = vmatprep.subr.bf16.mxu0 %v1381
      %1540 = vmatpush1.bf16.msra.mxu0 %v1380
      %1541 = vmatprep.subr.bf16.mxu0 %v1377
      %1542 = vmatpush1.bf16.msra.mxu0 %v1376
      %1543 = vmatprep.subr.bf16.mxu0 %v1373
      %1544 = vmatpush1.bf16.msra.mxu0 %v1372
      %1545 = vmatprep.subr.bf16.mxu0 %v1369
      %1546 = vmatpush1.bf16.msra.mxu0 %v1368
      %1547 = vmatprep.subr.bf16.mxu0 %v1365
      %1548 = vmatpush1.bf16.msra.mxu0 %v1364
      %1549 = vmatprep.subr.bf16.mxu0 %v1425
      %1550 = vmatpush2.bf16.msra.mxu0 %v1424
      %1551 = vmatprep.subr.bf16.mxu0 %v1421
      %1552 = vmatpush2.bf16.msra.mxu0 %v1420
      %1553 = vmatprep.subr.bf16.mxu0 %v1417
      %1554 = vmatpush2.bf16.msra.mxu0 %v1416
      %1555 = vmatprep.subr.bf16.mxu0 %v1413
      %1556 = vmatpush2.bf16.msra.mxu0 %v1412
      %1557 = vmatprep.subr.bf16.mxu0 %v1409
      %1558 = vmatpush2.bf16.msra.mxu0 %v1408
      %1559 = vmatprep.subr.bf16.mxu0 %v1405
      %1560 = vmatpush2.bf16.msra.mxu0 %v1404
      %1561 = vmatprep.subr.bf16.mxu0 %v1401
      %1562 = vmatpush2.bf16.msra.mxu0 %v1400
      %1563 = vmatprep.subr.bf16.mxu0 %v1397
      %1564 = vmatpush2.bf16.msra.mxu0 %v1396
      %1565 = vmatprep.mubr.bf16.mxu0 %v1083
      %1566 = vmatmul.mubr.bf16.gmra.mxu0 %v1082
      %v1567 = vpop.f32.mrf.mxu0
      %v1568 = vadd.f32 %v1161, %v1567
      %v1569 = vpop.f32.mrf.mxu0
      %v1570 = vadd.f32 %v1165, %v1569
      %v1571 = vpop.f32.mrf.mxu0
      %v1572 = vadd.f32 %v1161, %v1571
      %v1573 = vpop.f32.mrf.mxu0
      %v1574 = vadd.f32 %v1165, %v1573
      %1575 = vdwg.mxu0
      %1576 = vst [vmem:[%s224] sm:$0xff] %v1525
      %1577 = vst [vmem:[%s224 + $0x8] sm:$0xff] %v1527
      %1578 = vst [vmem:[%s224 + $0x10] sm:$0xff] %v1568
      %1579 = vst [vmem:[%s224 + $0x18] sm:$0xff] %v1570
      %1580 = vst [vmem:[%s224 + $0x20] sm:$0xff] %v1529
      %1581 = vst [vmem:[%s224 + $0x28] sm:$0xff] %v1531
      %1582 = vst [vmem:[%s224 + $0x30] sm:$0xff] %v1572
      %1583 = vst [vmem:[%s224 + $0x38] sm:$0xff] %v1574
      %p1584 = scmp.lt.s32.totalorder %s16, 1
      %s1585 = scalar_select %p1584, %s16, 1
      %s1586 = smul.addr %s1585, 8
      %s1587 = smul.addr %s1586, 8
      %s1588 = scalar_lea.vmem %s5, %s1587
      // Predicated region
      $region41: #{_lambda_.1} parent=39 // pred_check
        %p1589 = pneg %p144
      $region42: #{_lambda_.1} parent=39 // pred_check_branch
        %1591 = sbr.rel (%p1589) target = $region44
      $region43: #{_lambda_.1} parent=39 // pred_region
        _
      $region44: #{_lambda_.1} parent=39 // pred_fallthru
        _
    $region40: #{_lambda_.1} parent=5 // pred_fallthru
      _
    %p1592 = scmp.le.s32.totalorder 2, %s11
    // Predicated region
    $region45: #{_lambda_.1} parent=5 // pred_check
      %p1593 = pneg %p1592
    $region46: #{_lambda_.1} parent=5 // pred_check_branch
      %1595 = sbr.rel (%p1593) target = $region48
    $region47: #{_lambda_.1} parent=5 // pred_region
      %s1596 = ssub.s32 %s11, 2
      // Predicated region
      $region49: #{_lambda_.1} parent=47 // pred_check
        %p1597 = pneg %p150
      $region50: #{_lambda_.1} parent=47 // pred_check_branch
        %1599 = sbr.rel (%p1597) target = $region52
      $region51: #{_lambda_.1} parent=47 // pred_region
        %p1600 = scmp.lt.s32.totalorder %s17, 1
        %s1601 = scalar_select %p1600, %s17, 1
        %s1602 = smul.addr %s1601, 8
        %s1603 = smul.addr %s1602, 8
        %s1604 = scalar_lea.vmem %s5, %s1603
      $region52: #{_lambda_.1} parent=47 // pred_fallthru
        _
    $region48: #{_lambda_.1} parent=5 // pred_fallthru
      _
  $region6: #{_lambda_.1} parent=0 // loop_footer
    %s15 = sadd.s32 1, %s11
  $region7: #{_lambda_.1} parent=0 // loop_footer_branch
    %10 = sbr.rel target = $region3
  $region8: #{_lambda_.1} parent=0 // loop_exit
    _

</llo_original>
